<compile_context>
chip_gen: v7x
topology: tpu7x:2x2x1
jax: 0.10.0
libtpu: 0.0.40
codegen_flags: <defaults>
</compile_context>

<pallas_src>
import jax
import jax.numpy as jnp
import numpy as np
from jax.experimental import pallas as pl
from jax.experimental.pallas import tpu as pltpu

HI = jax.lax.Precision.HIGHEST   # reference only
LN_EPS = 1e-5                    # match torch.nn.LayerNorm default


def simlpe_kernel(x_ref, w_in_ref, b_in_ref, wfc_ref, bfc_ref, s_ref,
                  gamma_ref, beta_ref, att_ref, g_ref, w_out_ref, b_out_ref,
                  o_ref):
    # x_ref     : (T, BPD)        motion input, lane-dense (b,p,d) lanes
    # w_in_ref  : (BPD, BPD)      block-diag kron(I_BP, W_in^T)
    # b_in_ref  : (1, BPD)
    # wfc_ref   : (L, T, T)       temporal FC weights
    # bfc_ref   : (L, T, 1)
    # s_ref     : (BPD, BPD)      block-diag ones(D,D)/D (LayerNorm averaging)
    # gamma_ref : (L, 1, BPD)     lane-expanded LN scale
    # beta_ref  : (L, 1, BPD)     lane-expanded LN shift
    # att_ref   : (P, T, BPD)     lane-expanded softmax(-dist) weights
    # g_ref     : (P, BPD, BPD)   0/1 gather: feats @ g[q] tiles person-q block
    # w_out_ref : (BPD, B*P*3D)   block-diag kron(I_BP, W_out^T)
    # b_out_ref : (1, B*P*3D)
    # o_ref     : (T, B*P*3D)     lane-dense output slab
    n_layers = wfc_ref.shape[0]
    n_persons = g_ref.shape[0]

    # ---- motion_fc_in : Linear over D as a block-diagonal matmul ----
    feats = (jnp.dot(x_ref[...], w_in_ref[...],
                     preferred_element_type=jnp.float32) + b_in_ref[...])

    # ---- motion_mlp blocks: temporal FC + LayerNorm + inter-person mix ----
    for l in range(n_layers):
        # temporal FC over the time (sublane) axis: (T,T) @ (T, BPD)
        y = (jnp.dot(wfc_ref[l], feats, preferred_element_type=jnp.float32)
             + bfc_ref[l])
        # LayerNorm over D in the lane-dense layout: per-(t,b,p) statistics via
        # the block-diagonal averaging matrix (MXU), two-pass variance.
        mu = jnp.dot(y, s_ref[...], preferred_element_type=jnp.float32)
        yc = y - mu
        var = jnp.dot(yc * yc, s_ref[...], preferred_element_type=jnp.float32)
        y = yc * jax.lax.rsqrt(var + LN_EPS) * gamma_ref[l] + beta_ref[l]
        # distance-weighted inter-person mixing: gather/tile person-q's block
        # with a constant 0/1 matrix (idle MXU absorbs it), weight on the VPU.
        z = jnp.zeros_like(feats)
        for q in range(n_persons):
            fq = jnp.dot(feats, g_ref[q], preferred_element_type=jnp.float32)
            z = z + att_ref[q] * fq
        feats = feats + y + z

    # ---- motion_fc_out : Linear D -> 3D, single bf16 MXU pass, lane-dense ----
    out = (jnp.dot(feats, w_out_ref[...], preferred_element_type=jnp.float32)
           + b_out_ref[...])
    o_ref[...] = out


def simlpe_forward(motion_input, traj, params):
    """motion_input: (B, P, N, D); traj: (B, P, N, J, K).  Returns (B, P, 3N, D)."""
    B, P, N, D = motion_input.shape
    L = params['wfc'].shape[0]
    BPD = B * P * D
    f32 = jnp.float32

    # --- glue: tiny attention preprocessing in plain XLA --------------------
    # compute_distances_hierarchical_normalization(zero_score=False): the
    # centroid subtraction cancels exactly in the pairwise difference.
    pos = traj[:, :, :, 0, :]                                # (B, P, N, K)
    diff = pos[:, :, None, :, :] - pos[:, None, :, :, :]     # (B, P, P, N, K)
    dist = jnp.sqrt(jnp.sum(diff * diff, axis=-1))           # (B, P, P, N)
    dist = jnp.transpose(dist, (0, 3, 1, 2))                 # (B, N, P, P)
    att = jax.nn.softmax(-dist, axis=-1)                     # (B, N, P, P)
    # lane-expanded: att_exp[q, t, b*P*D + p*D + d] = att[b, t, p, q]
    att_exp = jnp.transpose(att, (3, 1, 0, 2))               # (P, N, B, P)
    att_exp = jnp.broadcast_to(att_exp[..., None], (P, N, B, P, D))
    att_exp = att_exp.reshape(P, N, BPD).astype(f32)

    # --- glue: lane-dense input slab (T, B*P*D) ------------------------------
    x_slab = jnp.transpose(motion_input, (2, 0, 1, 3)).reshape(N, BPD)

    # --- glue: block-diagonal / lane-expanded parameter layouts --------------
    eye_bp = jnp.eye(B * P, dtype=f32)
    w_in_big = jnp.kron(eye_bp, params['w_in'].T.astype(f32))         # (BPD, BPD)
    b_in_big = jnp.tile(params['b_in'].reshape(1, D), (1, B * P))     # (1, BPD)
    w_out_big = jnp.kron(eye_bp, params['w_out'].T.astype(f32))       # (BPD, 3BPD)
    b_out_big = jnp.tile(params['b_out'].reshape(1, 3 * D), (1, B * P))
    s_mat = jnp.kron(eye_bp, jnp.full((D, D), 1.0 / D, f32))          # (BPD, BPD)
    gamma_big = jnp.tile(params['gamma'], (1, B * P)).reshape(L, 1, BPD)
    beta_big = jnp.tile(params['beta'], (1, B * P)).reshape(L, 1, BPD)
    bfc = params['bfc'].reshape(L, N, 1)

    # constant 0/1 gather matrices: (feats @ g[q]) tiles person-q's D-block to
    # every person slot inside the same batch element
    g_np = np.zeros((P, BPD, BPD), np.float32)
    eye_d = np.eye(D, dtype=np.float32)
    eye_b = np.eye(B, dtype=np.float32)
    for q in range(P):
        e_q = np.zeros((P, P), np.float32)
        e_q[q, :] = 1.0
        g_np[q] = np.kron(eye_b, np.kron(e_q, eye_d))
    g_mats = jnp.asarray(g_np)                                         # (P, BPD, BPD)

    out_slab = pl.pallas_call(
        simlpe_kernel,
        out_shape=jax.ShapeDtypeStruct((N, B * P * 3 * D), jnp.float32),
        grid_spec=pltpu.PrefetchScalarGridSpec(
            num_scalar_prefetch=0,
            grid=(1,),
            in_specs=[
                pl.BlockSpec((N, BPD), lambda i: (0, 0)),
                pl.BlockSpec((BPD, BPD), lambda i: (0, 0)),
                pl.BlockSpec((1, BPD), lambda i: (0, 0)),
                pl.BlockSpec((L, N, N), lambda i: (0, 0, 0)),
                pl.BlockSpec((L, N, 1), lambda i: (0, 0, 0)),
                pl.BlockSpec((BPD, BPD), lambda i: (0, 0)),
                pl.BlockSpec((L, 1, BPD), lambda i: (0, 0, 0)),
                pl.BlockSpec((L, 1, BPD), lambda i: (0, 0, 0)),
                pl.BlockSpec((P, N, BPD), lambda i: (0, 0, 0)),
                pl.BlockSpec((P, BPD, BPD), lambda i: (0, 0, 0)),
                pl.BlockSpec((BPD, B * P * 3 * D), lambda i: (0, 0)),
                pl.BlockSpec((1, B * P * 3 * D), lambda i: (0, 0)),
            ],
            out_specs=pl.BlockSpec((N, B * P * 3 * D), lambda i: (0, 0)),
        ),
        compiler_params=pltpu.CompilerParams(
            dimension_semantics=("arbitrary",)),
    )(x_slab, w_in_big, b_in_big, params['wfc'], bfc, s_mat, gamma_big,
      beta_big, att_exp, g_mats, w_out_big, b_out_big)

    # glue: undo lane-dense packing, then the PyTorch reshape chain
    # (b, p, t, 3, d) -> (b, p, 3t, d)
    out = out_slab.reshape(N, B, P, 3, D)
    out = jnp.transpose(out, (1, 2, 0, 3, 4))                          # (B,P,N,3,D)
    out = out.reshape(B, P, 3 * N, D)
    return out


def reference_forward(motion_input, traj, params):
    """Pure-JAX mirror of the PyTorch forward (same block definition)."""
    B, P, N, D = motion_input.shape
    L = params['wfc'].shape[0]

    pos = traj[:, :, :, 0, :]                                          # (B, P, N, K)
    cen = pos.mean(axis=1, keepdims=True)
    npn = pos - cen
    diff = npn[:, :, None, :, :] - npn[:, None, :, :, :]               # (B, P, P, N, K)
    dist = jnp.sqrt(jnp.sum(diff * diff, axis=-1))                     # (B, P, P, N)
    dist = jnp.transpose(dist, (0, 3, 1, 2))                           # (B, N, P, P)
    att = jax.nn.softmax(-dist, axis=-1)

    x = jnp.einsum('bpnd,ed->bpne', motion_input, params['w_in'],
                   precision=HI) + params['b_in']
    x = jnp.transpose(x, (0, 1, 3, 2))                                 # arr0: (B,P,D,N)
    for l in range(L):
        wfc = params['wfc'][l]
        bfc = params['bfc'][l]
        gamma = params['gamma'][l]
        beta = params['beta'][l]
        y = jnp.einsum('bpdn,mn->bpdm', x, wfc, precision=HI) + bfc[None, None, None, :]
        mu = y.mean(axis=2, keepdims=True)
        var = ((y - mu) ** 2).mean(axis=2, keepdims=True)
        y = (y - mu) * jax.lax.rsqrt(var + LN_EPS) * gamma[None, None, :, None] \
            + beta[None, None, :, None]
        z = jnp.einsum('bnpq,bqdn->bpdn', att, x, precision=HI)
        x = x + y + z
    x = jnp.transpose(x, (0, 1, 3, 2))                                 # arr1: (B,P,N,D)
    out = jnp.einsum('bpnd,ed->bpne', x, params['w_out'],
                     precision=HI) + params['b_out']
    out = out.reshape(B, P, N, 3, D).reshape(B, P, 3 * N, D)
    return out


def _norm_max_err(out, ref):
    rms = float(jnp.sqrt(jnp.mean(ref * ref))) + 1e-12
    return float(jnp.max(jnp.abs(out - ref))) / rms


if __name__ == "__main__":
    B, P, N, D, J, K, L = 2, 4, 8, 32, 4, 3, 2

    key = jax.random.PRNGKey(0)
    ks = jax.random.split(key, 8)
    motion_input = jax.random.normal(ks[0], (B, P, N, D), jnp.float32)
    traj = jax.random.normal(ks[1], (B, P, N, J, K), jnp.float32)

    # xavier_uniform(gain=1e-8) for motion_fc_out, zero bias (as in reset_parameters)
    bound_out = 1e-8 * (6.0 / (D + 3 * D)) ** 0.5
    params = dict(
        w_in=jax.random.normal(ks[2], (D, D), jnp.float32) * (1.0 / D ** 0.5),
        b_in=jax.random.normal(ks[3], (D,), jnp.float32) * 0.01,
        wfc=jax.random.normal(ks[4], (L, N, N), jnp.float32) * (1.0 / N ** 0.5),
        bfc=jax.random.normal(ks[5], (L, N), jnp.float32) * 0.01,
        gamma=jnp.ones((L, D), jnp.float32),
        beta=jnp.zeros((L, D), jnp.float32),
        w_out=jax.random.uniform(ks[6], (3 * D, D), jnp.float32,
                                 minval=-bound_out, maxval=bound_out),
        b_out=jnp.zeros((3 * D,), jnp.float32),
    )

    # spec-faithful check (tiny xavier(1e-8) output head); normalized max error
    # tolerance covers the single-pass bf16 MXU precision inside the kernel.
    out = jax.block_until_ready(simlpe_forward(motion_input, traj, params))
    assert out.shape == (B, P, 3 * N, D), out.shape
    ref = reference_forward(motion_input, traj, params)
    err = _norm_max_err(out, ref)
    assert err < 5e-2, err

    # extra check with a realistically-scaled output head so fc_out is
    # numerically exercised.
    params_real = dict(params)
    params_real['w_out'] = jax.random.normal(ks[7], (3 * D, D), jnp.float32) * (1.0 / D ** 0.5)
    out_r = jax.block_until_ready(simlpe_forward(motion_input, traj, params_real))
    ref_r = reference_forward(motion_input, traj, params_real)
    err_r = _norm_max_err(out_r, ref_r)
    assert err_r < 5e-2, err_r

    print("KERNEL_OK")
</pallas_src>

<mosaic_0001>
module attributes {stable_mosaic.version = 11 : i64} {
  func.func @simlpe_kernel(%arg0: i32, %arg1: memref<8x256xf32, #tpu.memory_space<vmem>>, %arg2: memref<256x256xf32, #tpu.memory_space<vmem>>, %arg3: memref<1x256xf32, #tpu.memory_space<vmem>>, %arg4: memref<2x8x8xf32, #tpu.memory_space<vmem>>, %arg5: memref<2x8x1xf32, #tpu.memory_space<vmem>>, %arg6: memref<256x256xf32, #tpu.memory_space<vmem>>, %arg7: memref<2x1x256xf32, #tpu.memory_space<vmem>>, %arg8: memref<2x1x256xf32, #tpu.memory_space<vmem>>, %arg9: memref<4x8x256xf32, #tpu.memory_space<vmem>>, %arg10: memref<4x256x256xf32, #tpu.memory_space<vmem>>, %arg11: memref<256x768xf32, #tpu.memory_space<vmem>>, %arg12: memref<1x768xf32, #tpu.memory_space<vmem>>, %arg13: memref<8x768xf32, #tpu.memory_space<vmem>>) attributes {dimension_semantics = [#tpu.dimension_semantics<arbitrary>], iteration_bounds = array<i64: 1>, scalar_prefetch = 0 : i64, scratch_operands = 0 : i64, tpu.core_type = #tpu.core_type<tc>, window_params = [{pipeline_mode = #tpu.pipeline_mode<synchronous>, transform_indices = @transform_0, window_bounds = array<i64: 8, 256>}, {pipeline_mode = #tpu.pipeline_mode<synchronous>, transform_indices = @transform_1, window_bounds = array<i64: 256, 256>}, {pipeline_mode = #tpu.pipeline_mode<synchronous>, transform_indices = @transform_2, window_bounds = array<i64: 1, 256>}, {pipeline_mode = #tpu.pipeline_mode<synchronous>, transform_indices = @transform_3, window_bounds = array<i64: 2, 8, 8>}, {pipeline_mode = #tpu.pipeline_mode<synchronous>, transform_indices = @transform_4, window_bounds = array<i64: 2, 8, 1>}, {pipeline_mode = #tpu.pipeline_mode<synchronous>, transform_indices = @transform_5, window_bounds = array<i64: 256, 256>}, {pipeline_mode = #tpu.pipeline_mode<synchronous>, transform_indices = @transform_6, window_bounds = array<i64: 2, 1, 256>}, {pipeline_mode = #tpu.pipeline_mode<synchronous>, transform_indices = @transform_7, window_bounds = array<i64: 2, 1, 256>}, {pipeline_mode = #tpu.pipeline_mode<synchronous>, transform_indices = @transform_8, window_bounds = array<i64: 4, 8, 256>}, {pipeline_mode = #tpu.pipeline_mode<synchronous>, transform_indices = @transform_9, window_bounds = array<i64: 4, 256, 256>}, {pipeline_mode = #tpu.pipeline_mode<synchronous>, transform_indices = @transform_10, window_bounds = array<i64: 256, 768>}, {pipeline_mode = #tpu.pipeline_mode<synchronous>, transform_indices = @transform_11, window_bounds = array<i64: 1, 768>}, {pipeline_mode = #tpu.pipeline_mode<synchronous>, transform_indices = @transform_12, window_bounds = array<i64: 8, 768>}]} {
    %c0 = arith.constant 0 : index
    %c0_0 = arith.constant 0 : index
    %0 = vector.load %arg1[%c0, %c0_0] : memref<8x256xf32, #tpu.memory_space<vmem>>, vector<8x256xf32>
    %c0_1 = arith.constant 0 : index
    %c0_2 = arith.constant 0 : index
    %1 = vector.load %arg2[%c0_1, %c0_2] : memref<256x256xf32, #tpu.memory_space<vmem>>, vector<256x256xf32>
    %cst = arith.constant dense<0.000000e+00> : vector<8x256xf32>
    %2 = tpu.matmul %0, %1, %cst {dimension_numbers = #tpu.dot_dimension_numbers<[1], [0], [0], [1], [0, 0, 1, 1], [], []>} : vector<8x256xf32>, vector<256x256xf32>, vector<8x256xf32> -> vector<8x256xf32>
    %c0_3 = arith.constant 0 : index
    %c0_4 = arith.constant 0 : index
    %3 = vector.load %arg3[%c0_3, %c0_4] : memref<1x256xf32, #tpu.memory_space<vmem>>, vector<1x256xf32>
    %4 = vector.broadcast %3 : vector<1x256xf32> to vector<8x256xf32>
    %5 = arith.addf %2, %4 : vector<8x256xf32>
    %c0_5 = arith.constant 0 : index
    %c0_6 = arith.constant 0 : index
    %c0_7 = arith.constant 0 : index
    %6 = vector.load %arg4[%c0_5, %c0_6, %c0_7] : memref<2x8x8xf32, #tpu.memory_space<vmem>>, vector<1x8x8xf32>
    %7 = vector.shape_cast %6 : vector<1x8x8xf32> to vector<8x8xf32>
    %cst_8 = arith.constant dense<0.000000e+00> : vector<8x256xf32>
    %8 = tpu.matmul %7, %5, %cst_8 {dimension_numbers = #tpu.dot_dimension_numbers<[1], [0], [0], [1], [0, 0, 1, 1], [], []>} : vector<8x8xf32>, vector<8x256xf32>, vector<8x256xf32> -> vector<8x256xf32>
    %c0_9 = arith.constant 0 : index
    %c0_10 = arith.constant 0 : index
    %c0_11 = arith.constant 0 : index
    %9 = vector.load %arg5[%c0_9, %c0_10, %c0_11] : memref<2x8x1xf32, #tpu.memory_space<vmem>>, vector<1x8x1xf32>
    %10 = vector.shape_cast %9 : vector<1x8x1xf32> to vector<8x1xf32>
    %11 = vector.broadcast %10 : vector<8x1xf32> to vector<8x256xf32>
    %12 = arith.addf %8, %11 : vector<8x256xf32>
    %c0_12 = arith.constant 0 : index
    %c0_13 = arith.constant 0 : index
    %13 = vector.load %arg6[%c0_12, %c0_13] : memref<256x256xf32, #tpu.memory_space<vmem>>, vector<256x256xf32>
    %cst_14 = arith.constant dense<0.000000e+00> : vector<8x256xf32>
    %14 = tpu.matmul %12, %13, %cst_14 {dimension_numbers = #tpu.dot_dimension_numbers<[1], [0], [0], [1], [0, 0, 1, 1], [], []>} : vector<8x256xf32>, vector<256x256xf32>, vector<8x256xf32> -> vector<8x256xf32>
    %15 = arith.subf %12, %14 : vector<8x256xf32>
    %16 = arith.mulf %15, %15 : vector<8x256xf32>
    %c0_15 = arith.constant 0 : index
    %c0_16 = arith.constant 0 : index
    %17 = vector.load %arg6[%c0_15, %c0_16] : memref<256x256xf32, #tpu.memory_space<vmem>>, vector<256x256xf32>
    %cst_17 = arith.constant dense<0.000000e+00> : vector<8x256xf32>
    %18 = tpu.matmul %16, %17, %cst_17 {dimension_numbers = #tpu.dot_dimension_numbers<[1], [0], [0], [1], [0, 0, 1, 1], [], []>} : vector<8x256xf32>, vector<256x256xf32>, vector<8x256xf32> -> vector<8x256xf32>
    %cst_18 = arith.constant 9.99999974E-6 : f32
    %19 = vector.broadcast %cst_18 : f32 to vector<8x256xf32>
    %20 = arith.addf %18, %19 : vector<8x256xf32>
    %21 = math.rsqrt %20 : vector<8x256xf32>
    %22 = arith.mulf %15, %21 : vector<8x256xf32>
    %c0_19 = arith.constant 0 : index
    %c0_20 = arith.constant 0 : index
    %c0_21 = arith.constant 0 : index
    %23 = vector.load %arg7[%c0_19, %c0_20, %c0_21] : memref<2x1x256xf32, #tpu.memory_space<vmem>>, vector<1x1x256xf32>
    %24 = vector.shape_cast %23 : vector<1x1x256xf32> to vector<1x256xf32>
    %25 = vector.broadcast %24 : vector<1x256xf32> to vector<8x256xf32>
    %26 = arith.mulf %22, %25 : vector<8x256xf32>
    %c0_22 = arith.constant 0 : index
    %c0_23 = arith.constant 0 : index
    %c0_24 = arith.constant 0 : index
    %27 = vector.load %arg8[%c0_22, %c0_23, %c0_24] : memref<2x1x256xf32, #tpu.memory_space<vmem>>, vector<1x1x256xf32>
    %28 = vector.shape_cast %27 : vector<1x1x256xf32> to vector<1x256xf32>
    %29 = vector.broadcast %28 : vector<1x256xf32> to vector<8x256xf32>
    %30 = arith.addf %26, %29 : vector<8x256xf32>
    %cst_25 = arith.constant 0.000000e+00 : f32
    %31 = vector.broadcast %cst_25 : f32 to vector<8x256xf32>
    %c0_26 = arith.constant 0 : index
    %c0_27 = arith.constant 0 : index
    %c0_28 = arith.constant 0 : index
    %32 = vector.load %arg10[%c0_26, %c0_27, %c0_28] : memref<4x256x256xf32, #tpu.memory_space<vmem>>, vector<1x256x256xf32>
    %33 = vector.shape_cast %32 : vector<1x256x256xf32> to vector<256x256xf32>
    %cst_29 = arith.constant dense<0.000000e+00> : vector<8x256xf32>
    %34 = tpu.matmul %5, %33, %cst_29 {dimension_numbers = #tpu.dot_dimension_numbers<[1], [0], [0], [1], [0, 0, 1, 1], [], []>} : vector<8x256xf32>, vector<256x256xf32>, vector<8x256xf32> -> vector<8x256xf32>
    %c0_30 = arith.constant 0 : index
    %c0_31 = arith.constant 0 : index
    %c0_32 = arith.constant 0 : index
    %35 = vector.load %arg9[%c0_30, %c0_31, %c0_32] : memref<4x8x256xf32, #tpu.memory_space<vmem>>, vector<1x8x256xf32>
    %36 = vector.shape_cast %35 : vector<1x8x256xf32> to vector<8x256xf32>
    %37 = arith.mulf %36, %34 : vector<8x256xf32>
    %38 = arith.addf %31, %37 : vector<8x256xf32>
    %c1 = arith.constant 1 : index
    %c0_33 = arith.constant 0 : index
    %c0_34 = arith.constant 0 : index
    %39 = vector.load %arg10[%c1, %c0_33, %c0_34] : memref<4x256x256xf32, #tpu.memory_space<vmem>>, vector<1x256x256xf32>
    %40 = vector.shape_cast %39 : vector<1x256x256xf32> to vector<256x256xf32>
    %cst_35 = arith.constant dense<0.000000e+00> : vector<8x256xf32>
    %41 = tpu.matmul %5, %40, %cst_35 {dimension_numbers = #tpu.dot_dimension_numbers<[1], [0], [0], [1], [0, 0, 1, 1], [], []>} : vector<8x256xf32>, vector<256x256xf32>, vector<8x256xf32> -> vector<8x256xf32>
    %c1_36 = arith.constant 1 : index
    %c0_37 = arith.constant 0 : index
    %c0_38 = arith.constant 0 : index
    %42 = vector.load %arg9[%c1_36, %c0_37, %c0_38] : memref<4x8x256xf32, #tpu.memory_space<vmem>>, vector<1x8x256xf32>
    %43 = vector.shape_cast %42 : vector<1x8x256xf32> to vector<8x256xf32>
    %44 = arith.mulf %43, %41 : vector<8x256xf32>
    %45 = arith.addf %38, %44 : vector<8x256xf32>
    %c2 = arith.constant 2 : index
    %c0_39 = arith.constant 0 : index
    %c0_40 = arith.constant 0 : index
    %46 = vector.load %arg10[%c2, %c0_39, %c0_40] : memref<4x256x256xf32, #tpu.memory_space<vmem>>, vector<1x256x256xf32>
    %47 = vector.shape_cast %46 : vector<1x256x256xf32> to vector<256x256xf32>
    %cst_41 = arith.constant dense<0.000000e+00> : vector<8x256xf32>
    %48 = tpu.matmul %5, %47, %cst_41 {dimension_numbers = #tpu.dot_dimension_numbers<[1], [0], [0], [1], [0, 0, 1, 1], [], []>} : vector<8x256xf32>, vector<256x256xf32>, vector<8x256xf32> -> vector<8x256xf32>
    %c2_42 = arith.constant 2 : index
    %c0_43 = arith.constant 0 : index
    %c0_44 = arith.constant 0 : index
    %49 = vector.load %arg9[%c2_42, %c0_43, %c0_44] : memref<4x8x256xf32, #tpu.memory_space<vmem>>, vector<1x8x256xf32>
    %50 = vector.shape_cast %49 : vector<1x8x256xf32> to vector<8x256xf32>
    %51 = arith.mulf %50, %48 : vector<8x256xf32>
    %52 = arith.addf %45, %51 : vector<8x256xf32>
    %c3 = arith.constant 3 : index
    %c0_45 = arith.constant 0 : index
    %c0_46 = arith.constant 0 : index
    %53 = vector.load %arg10[%c3, %c0_45, %c0_46] : memref<4x256x256xf32, #tpu.memory_space<vmem>>, vector<1x256x256xf32>
    %54 = vector.shape_cast %53 : vector<1x256x256xf32> to vector<256x256xf32>
    %cst_47 = arith.constant dense<0.000000e+00> : vector<8x256xf32>
    %55 = tpu.matmul %5, %54, %cst_47 {dimension_numbers = #tpu.dot_dimension_numbers<[1], [0], [0], [1], [0, 0, 1, 1], [], []>} : vector<8x256xf32>, vector<256x256xf32>, vector<8x256xf32> -> vector<8x256xf32>
    %c3_48 = arith.constant 3 : index
    %c0_49 = arith.constant 0 : index
    %c0_50 = arith.constant 0 : index
    %56 = vector.load %arg9[%c3_48, %c0_49, %c0_50] : memref<4x8x256xf32, #tpu.memory_space<vmem>>, vector<1x8x256xf32>
    %57 = vector.shape_cast %56 : vector<1x8x256xf32> to vector<8x256xf32>
    %58 = arith.mulf %57, %55 : vector<8x256xf32>
    %59 = arith.addf %52, %58 : vector<8x256xf32>
    %60 = arith.addf %5, %30 : vector<8x256xf32>
    %61 = arith.addf %60, %59 : vector<8x256xf32>
    %c1_51 = arith.constant 1 : index
    %c0_52 = arith.constant 0 : index
    %c0_53 = arith.constant 0 : index
    %62 = vector.load %arg4[%c1_51, %c0_52, %c0_53] : memref<2x8x8xf32, #tpu.memory_space<vmem>>, vector<1x8x8xf32>
    %63 = vector.shape_cast %62 : vector<1x8x8xf32> to vector<8x8xf32>
    %cst_54 = arith.constant dense<0.000000e+00> : vector<8x256xf32>
    %64 = tpu.matmul %63, %61, %cst_54 {dimension_numbers = #tpu.dot_dimension_numbers<[1], [0], [0], [1], [0, 0, 1, 1], [], []>} : vector<8x8xf32>, vector<8x256xf32>, vector<8x256xf32> -> vector<8x256xf32>
    %c1_55 = arith.constant 1 : index
    %c0_56 = arith.constant 0 : index
    %c0_57 = arith.constant 0 : index
    %65 = vector.load %arg5[%c1_55, %c0_56, %c0_57] : memref<2x8x1xf32, #tpu.memory_space<vmem>>, vector<1x8x1xf32>
    %66 = vector.shape_cast %65 : vector<1x8x1xf32> to vector<8x1xf32>
    %67 = vector.broadcast %66 : vector<8x1xf32> to vector<8x256xf32>
    %68 = arith.addf %64, %67 : vector<8x256xf32>
    %c0_58 = arith.constant 0 : index
    %c0_59 = arith.constant 0 : index
    %69 = vector.load %arg6[%c0_58, %c0_59] : memref<256x256xf32, #tpu.memory_space<vmem>>, vector<256x256xf32>
    %cst_60 = arith.constant dense<0.000000e+00> : vector<8x256xf32>
    %70 = tpu.matmul %68, %69, %cst_60 {dimension_numbers = #tpu.dot_dimension_numbers<[1], [0], [0], [1], [0, 0, 1, 1], [], []>} : vector<8x256xf32>, vector<256x256xf32>, vector<8x256xf32> -> vector<8x256xf32>
    %71 = arith.subf %68, %70 : vector<8x256xf32>
    %72 = arith.mulf %71, %71 : vector<8x256xf32>
    %c0_61 = arith.constant 0 : index
    %c0_62 = arith.constant 0 : index
    %73 = vector.load %arg6[%c0_61, %c0_62] : memref<256x256xf32, #tpu.memory_space<vmem>>, vector<256x256xf32>
    %cst_63 = arith.constant dense<0.000000e+00> : vector<8x256xf32>
    %74 = tpu.matmul %72, %73, %cst_63 {dimension_numbers = #tpu.dot_dimension_numbers<[1], [0], [0], [1], [0, 0, 1, 1], [], []>} : vector<8x256xf32>, vector<256x256xf32>, vector<8x256xf32> -> vector<8x256xf32>
    %cst_64 = arith.constant 9.99999974E-6 : f32
    %75 = vector.broadcast %cst_64 : f32 to vector<8x256xf32>
    %76 = arith.addf %74, %75 : vector<8x256xf32>
    %77 = math.rsqrt %76 : vector<8x256xf32>
    %78 = arith.mulf %71, %77 : vector<8x256xf32>
    %c1_65 = arith.constant 1 : index
    %c0_66 = arith.constant 0 : index
    %c0_67 = arith.constant 0 : index
    %79 = vector.load %arg7[%c1_65, %c0_66, %c0_67] : memref<2x1x256xf32, #tpu.memory_space<vmem>>, vector<1x1x256xf32>
    %80 = vector.shape_cast %79 : vector<1x1x256xf32> to vector<1x256xf32>
    %81 = vector.broadcast %80 : vector<1x256xf32> to vector<8x256xf32>
    %82 = arith.mulf %78, %81 : vector<8x256xf32>
    %c1_68 = arith.constant 1 : index
    %c0_69 = arith.constant 0 : index
    %c0_70 = arith.constant 0 : index
    %83 = vector.load %arg8[%c1_68, %c0_69, %c0_70] : memref<2x1x256xf32, #tpu.memory_space<vmem>>, vector<1x1x256xf32>
    %84 = vector.shape_cast %83 : vector<1x1x256xf32> to vector<1x256xf32>
    %85 = vector.broadcast %84 : vector<1x256xf32> to vector<8x256xf32>
    %86 = arith.addf %82, %85 : vector<8x256xf32>
    %cst_71 = arith.constant 0.000000e+00 : f32
    %87 = vector.broadcast %cst_71 : f32 to vector<8x256xf32>
    %c0_72 = arith.constant 0 : index
    %c0_73 = arith.constant 0 : index
    %c0_74 = arith.constant 0 : index
    %88 = vector.load %arg10[%c0_72, %c0_73, %c0_74] : memref<4x256x256xf32, #tpu.memory_space<vmem>>, vector<1x256x256xf32>
    %89 = vector.shape_cast %88 : vector<1x256x256xf32> to vector<256x256xf32>
    %cst_75 = arith.constant dense<0.000000e+00> : vector<8x256xf32>
    %90 = tpu.matmul %61, %89, %cst_75 {dimension_numbers = #tpu.dot_dimension_numbers<[1], [0], [0], [1], [0, 0, 1, 1], [], []>} : vector<8x256xf32>, vector<256x256xf32>, vector<8x256xf32> -> vector<8x256xf32>
    %c0_76 = arith.constant 0 : index
    %c0_77 = arith.constant 0 : index
    %c0_78 = arith.constant 0 : index
    %91 = vector.load %arg9[%c0_76, %c0_77, %c0_78] : memref<4x8x256xf32, #tpu.memory_space<vmem>>, vector<1x8x256xf32>
    %92 = vector.shape_cast %91 : vector<1x8x256xf32> to vector<8x256xf32>
    %93 = arith.mulf %92, %90 : vector<8x256xf32>
    %94 = arith.addf %87, %93 : vector<8x256xf32>
    %c1_79 = arith.constant 1 : index
    %c0_80 = arith.constant 0 : index
    %c0_81 = arith.constant 0 : index
    %95 = vector.load %arg10[%c1_79, %c0_80, %c0_81] : memref<4x256x256xf32, #tpu.memory_space<vmem>>, vector<1x256x256xf32>
    %96 = vector.shape_cast %95 : vector<1x256x256xf32> to vector<256x256xf32>
    %cst_82 = arith.constant dense<0.000000e+00> : vector<8x256xf32>
    %97 = tpu.matmul %61, %96, %cst_82 {dimension_numbers = #tpu.dot_dimension_numbers<[1], [0], [0], [1], [0, 0, 1, 1], [], []>} : vector<8x256xf32>, vector<256x256xf32>, vector<8x256xf32> -> vector<8x256xf32>
    %c1_83 = arith.constant 1 : index
    %c0_84 = arith.constant 0 : index
    %c0_85 = arith.constant 0 : index
    %98 = vector.load %arg9[%c1_83, %c0_84, %c0_85] : memref<4x8x256xf32, #tpu.memory_space<vmem>>, vector<1x8x256xf32>
    %99 = vector.shape_cast %98 : vector<1x8x256xf32> to vector<8x256xf32>
    %100 = arith.mulf %99, %97 : vector<8x256xf32>
    %101 = arith.addf %94, %100 : vector<8x256xf32>
    %c2_86 = arith.constant 2 : index
    %c0_87 = arith.constant 0 : index
    %c0_88 = arith.constant 0 : index
    %102 = vector.load %arg10[%c2_86, %c0_87, %c0_88] : memref<4x256x256xf32, #tpu.memory_space<vmem>>, vector<1x256x256xf32>
    %103 = vector.shape_cast %102 : vector<1x256x256xf32> to vector<256x256xf32>
    %cst_89 = arith.constant dense<0.000000e+00> : vector<8x256xf32>
    %104 = tpu.matmul %61, %103, %cst_89 {dimension_numbers = #tpu.dot_dimension_numbers<[1], [0], [0], [1], [0, 0, 1, 1], [], []>} : vector<8x256xf32>, vector<256x256xf32>, vector<8x256xf32> -> vector<8x256xf32>
    %c2_90 = arith.constant 2 : index
    %c0_91 = arith.constant 0 : index
    %c0_92 = arith.constant 0 : index
    %105 = vector.load %arg9[%c2_90, %c0_91, %c0_92] : memref<4x8x256xf32, #tpu.memory_space<vmem>>, vector<1x8x256xf32>
    %106 = vector.shape_cast %105 : vector<1x8x256xf32> to vector<8x256xf32>
    %107 = arith.mulf %106, %104 : vector<8x256xf32>
    %108 = arith.addf %101, %107 : vector<8x256xf32>
    %c3_93 = arith.constant 3 : index
    %c0_94 = arith.constant 0 : index
    %c0_95 = arith.constant 0 : index
    %109 = vector.load %arg10[%c3_93, %c0_94, %c0_95] : memref<4x256x256xf32, #tpu.memory_space<vmem>>, vector<1x256x256xf32>
    %110 = vector.shape_cast %109 : vector<1x256x256xf32> to vector<256x256xf32>
    %cst_96 = arith.constant dense<0.000000e+00> : vector<8x256xf32>
    %111 = tpu.matmul %61, %110, %cst_96 {dimension_numbers = #tpu.dot_dimension_numbers<[1], [0], [0], [1], [0, 0, 1, 1], [], []>} : vector<8x256xf32>, vector<256x256xf32>, vector<8x256xf32> -> vector<8x256xf32>
    %c3_97 = arith.constant 3 : index
    %c0_98 = arith.constant 0 : index
    %c0_99 = arith.constant 0 : index
    %112 = vector.load %arg9[%c3_97, %c0_98, %c0_99] : memref<4x8x256xf32, #tpu.memory_space<vmem>>, vector<1x8x256xf32>
    %113 = vector.shape_cast %112 : vector<1x8x256xf32> to vector<8x256xf32>
    %114 = arith.mulf %113, %111 : vector<8x256xf32>
    %115 = arith.addf %108, %114 : vector<8x256xf32>
    %116 = arith.addf %61, %86 : vector<8x256xf32>
    %117 = arith.addf %116, %115 : vector<8x256xf32>
    %c0_100 = arith.constant 0 : index
    %c0_101 = arith.constant 0 : index
    %118 = vector.load %arg11[%c0_100, %c0_101] : memref<256x768xf32, #tpu.memory_space<vmem>>, vector<256x768xf32>
    %cst_102 = arith.constant dense<0.000000e+00> : vector<8x768xf32>
    %119 = tpu.matmul %117, %118, %cst_102 {dimension_numbers = #tpu.dot_dimension_numbers<[1], [0], [0], [1], [0, 0, 1, 1], [], []>} : vector<8x256xf32>, vector<256x768xf32>, vector<8x768xf32> -> vector<8x768xf32>
    %c0_103 = arith.constant 0 : index
    %c0_104 = arith.constant 0 : index
    %120 = vector.load %arg12[%c0_103, %c0_104] : memref<1x768xf32, #tpu.memory_space<vmem>>, vector<1x768xf32>
    %121 = vector.broadcast %120 : vector<1x768xf32> to vector<8x768xf32>
    %122 = arith.addf %119, %121 : vector<8x768xf32>
    %c0_105 = arith.constant 0 : index
    %c0_106 = arith.constant 0 : index
    %123 = vector.load %arg13[%c0_105, %c0_106] : memref<8x768xf32, #tpu.memory_space<vmem>>, vector<8x768xf32>
    tpu.vector_store %arg13[%c0_105, %c0_106], %122 {strides = array<i32>} : memref<8x768xf32, #tpu.memory_space<vmem>>, vector<8x768xf32>,
    return
  }
  func.func @transform_0(%arg0: i32) -> (i32, i32) {
    %c0_i32 = arith.constant 0 : i32
    %c0_i32_0 = arith.constant 0 : i32
    %c0_i32_1 = arith.constant 0 : i32
    return %c0_i32, %c0_i32_0 : i32, i32
  }
  func.func @transform_1(%arg0: i32) -> (i32, i32) {
    %c0_i32 = arith.constant 0 : i32
    %c0_i32_0 = arith.constant 0 : i32
    %c0_i32_1 = arith.constant 0 : i32
    return %c0_i32, %c0_i32_0 : i32, i32
  }
  func.func @transform_2(%arg0: i32) -> (i32, i32) {
    %c0_i32 = arith.constant 0 : i32
    %c0_i32_0 = arith.constant 0 : i32
    %c0_i32_1 = arith.constant 0 : i32
    return %c0_i32, %c0_i32_0 : i32, i32
  }
  func.func @transform_3(%arg0: i32) -> (i32, i32, i32) {
    %c0_i32 = arith.constant 0 : i32
    %c0_i32_0 = arith.constant 0 : i32
    %c0_i32_1 = arith.constant 0 : i32
    %c0_i32_2 = arith.constant 0 : i32
    return %c0_i32, %c0_i32_0, %c0_i32_1 : i32, i32, i32
  }
  func.func @transform_4(%arg0: i32) -> (i32, i32, i32) {
    %c0_i32 = arith.constant 0 : i32
    %c0_i32_0 = arith.constant 0 : i32
    %c0_i32_1 = arith.constant 0 : i32
    %c0_i32_2 = arith.constant 0 : i32
    return %c0_i32, %c0_i32_0, %c0_i32_1 : i32, i32, i32
  }
  func.func @transform_5(%arg0: i32) -> (i32, i32) {
    %c0_i32 = arith.constant 0 : i32
    %c0_i32_0 = arith.constant 0 : i32
    %c0_i32_1 = arith.constant 0 : i32
    return %c0_i32, %c0_i32_0 : i32, i32
  }
  func.func @transform_6(%arg0: i32) -> (i32, i32, i32) {
    %c0_i32 = arith.constant 0 : i32
    %c0_i32_0 = arith.constant 0 : i32
    %c0_i32_1 = arith.constant 0 : i32
    %c0_i32_2 = arith.constant 0 : i32
    return %c0_i32, %c0_i32_0, %c0_i32_1 : i32, i32, i32
  }
  func.func @transform_7(%arg0: i32) -> (i32, i32, i32) {
    %c0_i32 = arith.constant 0 : i32
    %c0_i32_0 = arith.constant 0 : i32
    %c0_i32_1 = arith.constant 0 : i32
    %c0_i32_2 = arith.constant 0 : i32
    return %c0_i32, %c0_i32_0, %c0_i32_1 : i32, i32, i32
  }
  func.func @transform_8(%arg0: i32) -> (i32, i32, i32) {
    %c0_i32 = arith.constant 0 : i32
    %c0_i32_0 = arith.constant 0 : i32
    %c0_i32_1 = arith.constant 0 : i32
    %c0_i32_2 = arith.constant 0 : i32
    return %c0_i32, %c0_i32_0, %c0_i32_1 : i32, i32, i32
  }
  func.func @transform_9(%arg0: i32) -> (i32, i32, i32) {
    %c0_i32 = arith.constant 0 : i32
    %c0_i32_0 = arith.constant 0 : i32
    %c0_i32_1 = arith.constant 0 : i32
    %c0_i32_2 = arith.constant 0 : i32
    return %c0_i32, %c0_i32_0, %c0_i32_1 : i32, i32, i32
  }
  func.func @transform_10(%arg0: i32) -> (i32, i32) {
    %c0_i32 = arith.constant 0 : i32
    %c0_i32_0 = arith.constant 0 : i32
    %c0_i32_1 = arith.constant 0 : i32
    return %c0_i32, %c0_i32_0 : i32, i32
  }
  func.func @transform_11(%arg0: i32) -> (i32, i32) {
    %c0_i32 = arith.constant 0 : i32
    %c0_i32_0 = arith.constant 0 : i32
    %c0_i32_1 = arith.constant 0 : i32
    return %c0_i32, %c0_i32_0 : i32, i32
  }
  func.func @transform_12(%arg0: i32) -> (i32, i32) {
    %c0_i32 = arith.constant 0 : i32
    %c0_i32_0 = arith.constant 0 : i32
    %c0_i32_1 = arith.constant 0 : i32
    return %c0_i32, %c0_i32_0 : i32, i32
  }
}

</mosaic_0001>

<llo_original>
// kernel: tpu_custom_call.1
$region0: #{tpu_custom_call.1}
  #allocation0 [shape = 'u32[]', space=smem, size = 0x4, offset = 0x4, fixed_abs, tag = 'smem constant byte address 0x4 - core index']
  #allocation1 [shape = 'u32[144,128]{1,0:T(1,128)}', space=vmem, size = 0x12000, scoped, tag = 'internal scratch']
  %s0 = inlined_call_operand.vmem [shape: f32[8,256], index: 0, kind: input, shape index: {}]
  %s1 = inlined_call_operand.hbm [shape: f32[256,256], index: 1, kind: input, shape index: {}]
  %s2 = inlined_call_operand.vmem [shape: f32[1,256], index: 2, kind: input, shape index: {}]
  %s3 = inlined_call_operand.hbm [shape: f32[2,8,8], index: 3, kind: input, shape index: {}]
  %s4 = inlined_call_operand.vmem [shape: f32[2,8,1], index: 4, kind: input, shape index: {}]
  %s5 = inlined_call_operand.hbm [shape: f32[256,256], index: 5, kind: input, shape index: {}]
  %s6 = inlined_call_operand.vmem [shape: f32[2,1,256], index: 6, kind: input, shape index: {}]
  %s7 = inlined_call_operand.vmem [shape: f32[2,1,256], index: 7, kind: input, shape index: {}]
  %s8 = inlined_call_operand.hbm [shape: f32[4,8,256], index: 8, kind: input, shape index: {}]
  %s9 = inlined_call_operand.hbm [shape: f32[4,256,256], index: 9, kind: input, shape index: {}]
  %s10 = inlined_call_operand.hbm [shape: f32[256,768], index: 10, kind: input, shape index: {}]
  %s11 = inlined_call_operand.vmem [shape: f32[1,768], index: 11, kind: input, shape index: {}]
  %s12 = inlined_call_operand.hbm [shape: f32[8,768], index: 12, kind: output, shape index: {}]
  %s13 = sld [smem:[#allocation0]]
  $region82: #{tpu_custom_call.1} parent=0
    _
  %s15 = ssub.s32 1, %s13
  %s16 = scalar_select 0, %s15, %s13
  $region1: #{tpu_custom_call.1} parent=0
    #allocation2 [shape = 'u8[262144]{0}', space=vmem, size = 0x40000, scoped, tag = 'input window, operand 1, single buffered']
    #allocation3 [shape = 's32[1]{0}', space=sflag, size = 0x4, scoped, tag = 'scoped memory for tpu_custom_call.1']
    #allocation4 [shape = 's32[1]{0}', space=sflag, size = 0x4, scoped, tag = 'scoped memory for tpu_custom_call.1']
    #allocation5 [shape = 'u8[8192]{0}', space=vmem, size = 0x2000, scoped, tag = 'input window, operand 3, single buffered']
    #allocation6 [shape = 's32[1]{0}', space=sflag, size = 0x4, scoped, tag = 'scoped memory for tpu_custom_call.1']
    #allocation7 [shape = 'u8[262144]{0}', space=vmem, size = 0x40000, scoped, tag = 'input window, operand 5, single buffered']
    #allocation8 [shape = 'u8[32768]{0}', space=vmem, size = 0x8000, scoped, tag = 'input window, operand 8, single buffered']
    #allocation9 [shape = 's32[1]{0}', space=sflag, size = 0x4, scoped, tag = 'scoped memory for tpu_custom_call.1']
    #allocation10 [shape = 'u8[1048576]{0}', space=vmem, size = 0x100000, scoped, tag = 'input window, operand 9, single buffered']
    #allocation11 [shape = 'u8[786432]{0}', space=vmem, size = 0xc0000, scoped, tag = 'input window, operand 10, single buffered']
    #allocation12 [shape = 's32[1]{0}', space=sflag, size = 0x4, scoped, tag = 'scoped memory for tpu_custom_call.1']
    #allocation13 [shape = 'u8[24576]{0}', space=vmem, size = 0x6000, scoped, tag = 'output window, operand 0, single buffered']
    %17 = vsyncpa [#allocation3], 0
    %18 = vsyncpa [#allocation6], 0
    %19 = vsyncpa [#allocation9], 0
    %20 = vsyncpa [#allocation12], 0
    %21 = vsyncpa [#allocation4], 0
    // Predicated region
    $region2: #{tpu_custom_call.1} parent=1 // pred_check
      _
    $region3: #{tpu_custom_call.1} parent=1 // pred_check_branch
      %23 = sbr.rel (0) target = $region5
    $region4: #{tpu_custom_call.1} parent=1 // pred_region
      _
    $region5: #{tpu_custom_call.1} parent=1 // pred_fallthru
      _
    // Predicated region
    $region6: #{tpu_custom_call.1} parent=1 // pred_check
      _
    $region7: #{tpu_custom_call.1} parent=1 // pred_check_branch
      %25 = sbr.rel (0) target = $region9
    $region8: #{tpu_custom_call.1} parent=1 // pred_region
      %s27 = ssub.s32 8192, 8192
      %28 = vsyncadd [#allocation3], %s27
      %s29 = sshll.u32 [#allocation2], 4
      %s30 = int_to_ptr.vmem [resolvable:$true] %s29
      %35 = dma.hbm_to_vmem [thread:$0]  %s1, 8192, %s30, [#allocation3], 256, 256, 16
    $region9: #{tpu_custom_call.1} parent=1 // pred_fallthru
      _
    // Predicated region
    $region10: #{tpu_custom_call.1} parent=1 // pred_check
      _
    $region11: #{tpu_custom_call.1} parent=1 // pred_check_branch
      %37 = sbr.rel (0) target = $region13
    $region12: #{tpu_custom_call.1} parent=1 // pred_region
      _
    $region13: #{tpu_custom_call.1} parent=1 // pred_fallthru
      _
    // Predicated region
    $region14: #{tpu_custom_call.1} parent=1 // pred_check
      _
    $region15: #{tpu_custom_call.1} parent=1 // pred_check_branch
      %39 = sbr.rel (0) target = $region17
    $region16: #{tpu_custom_call.1} parent=1 // pred_region
      %s41 = ssub.s32 256, 256
      %42 = vsyncadd [#allocation6], %s41
      %s43 = sshll.u32 [#allocation5], 4
      %s44 = int_to_ptr.vmem [resolvable:$true] %s43
      %49 = dma.hbm_to_vmem [thread:$0]  %s3, 256, %s44, [#allocation6], 128, 128, 8
    $region17: #{tpu_custom_call.1} parent=1 // pred_fallthru
      _
    // Predicated region
    $region18: #{tpu_custom_call.1} parent=1 // pred_check
      _
    $region19: #{tpu_custom_call.1} parent=1 // pred_check_branch
      %51 = sbr.rel (0) target = $region21
    $region20: #{tpu_custom_call.1} parent=1 // pred_region
      _
    $region21: #{tpu_custom_call.1} parent=1 // pred_fallthru
      _
    // Predicated region
    $region22: #{tpu_custom_call.1} parent=1 // pred_check
      _
    $region23: #{tpu_custom_call.1} parent=1 // pred_check_branch
      %53 = sbr.rel (0) target = $region25
    $region24: #{tpu_custom_call.1} parent=1 // pred_region
      %s55 = ssub.s32 8192, 8192
      %56 = vsyncadd [#allocation6], %s55
      %s57 = sshll.u32 [#allocation7], 4
      %s58 = int_to_ptr.vmem [resolvable:$true] %s57
      %63 = dma.hbm_to_vmem [thread:$0]  %s5, 8192, %s58, [#allocation6], 256, 256, 16
    $region25: #{tpu_custom_call.1} parent=1 // pred_fallthru
      _
    // Predicated region
    $region26: #{tpu_custom_call.1} parent=1 // pred_check
      _
    $region27: #{tpu_custom_call.1} parent=1 // pred_check_branch
      %65 = sbr.rel (0) target = $region29
    $region28: #{tpu_custom_call.1} parent=1 // pred_region
      _
    $region29: #{tpu_custom_call.1} parent=1 // pred_fallthru
      _
    // Predicated region
    $region30: #{tpu_custom_call.1} parent=1 // pred_check
      _
    $region31: #{tpu_custom_call.1} parent=1 // pred_check_branch
      %67 = sbr.rel (0) target = $region33
    $region32: #{tpu_custom_call.1} parent=1 // pred_region
      _
    $region33: #{tpu_custom_call.1} parent=1 // pred_fallthru
      _
    // Predicated region
    $region34: #{tpu_custom_call.1} parent=1 // pred_check
      _
    $region35: #{tpu_custom_call.1} parent=1 // pred_check_branch
      %69 = sbr.rel (0) target = $region37
    $region36: #{tpu_custom_call.1} parent=1 // pred_region
      %s71 = ssub.s32 1024, 1024
      %72 = vsyncadd [#allocation9], %s71
      %s73 = sshll.u32 [#allocation8], 4
      %s74 = int_to_ptr.vmem [resolvable:$true] %s73
      %79 = dma.hbm_to_vmem [thread:$0]  %s8, 1024, %s74, [#allocation9], 256, 256, 16
    $region37: #{tpu_custom_call.1} parent=1 // pred_fallthru
      _
    // Predicated region
    $region38: #{tpu_custom_call.1} parent=1 // pred_check
      _
    $region39: #{tpu_custom_call.1} parent=1 // pred_check_branch
      %81 = sbr.rel (0) target = $region41
    $region40: #{tpu_custom_call.1} parent=1 // pred_region
      %s83 = ssub.s32 32768, 32768
      %84 = vsyncadd [#allocation9], %s83
      %s85 = sshll.u32 [#allocation10], 4
      %s86 = int_to_ptr.vmem [resolvable:$true] %s85
      %91 = dma.hbm_to_vmem [thread:$0]  %s9, 32768, %s86, [#allocation9], 256, 256, 16
    $region41: #{tpu_custom_call.1} parent=1 // pred_fallthru
      _
    // Predicated region
    $region42: #{tpu_custom_call.1} parent=1 // pred_check
      _
    $region43: #{tpu_custom_call.1} parent=1 // pred_check_branch
      %93 = sbr.rel (0) target = $region45
    $region44: #{tpu_custom_call.1} parent=1 // pred_region
      %s95 = ssub.s32 24576, 24576
      %96 = vsyncadd [#allocation12], %s95
      %s97 = sshll.u32 [#allocation11], 4
      %s98 = int_to_ptr.vmem [resolvable:$true] %s97
      %103 = dma.hbm_to_vmem [thread:$0]  %s10, 24576, %s98, [#allocation12], 768, 768, 48
    $region45: #{tpu_custom_call.1} parent=1 // pred_fallthru
      _
    // Predicated region
    $region46: #{tpu_custom_call.1} parent=1 // pred_check
      _
    $region47: #{tpu_custom_call.1} parent=1 // pred_check_branch
      %105 = sbr.rel (0) target = $region49
    $region48: #{tpu_custom_call.1} parent=1 // pred_region
      _
    $region49: #{tpu_custom_call.1} parent=1 // pred_fallthru
      _
    // Predicated region
    $region50: #{tpu_custom_call.1} parent=1 // pred_check
      _
    $region51: #{tpu_custom_call.1} parent=1 // pred_check_branch
      %107 = sbr.rel (0) target = $region53
    $region52: #{tpu_custom_call.1} parent=1 // pred_region
      %108 = dma.done [#allocation3], 8192
    $region53: #{tpu_custom_call.1} parent=1 // pred_fallthru
      _
    // Predicated region
    $region54: #{tpu_custom_call.1} parent=1 // pred_check
      _
    $region55: #{tpu_custom_call.1} parent=1 // pred_check_branch
      %110 = sbr.rel (0) target = $region57
    $region56: #{tpu_custom_call.1} parent=1 // pred_region
      %111 = dma.done [#allocation6], 256
    $region57: #{tpu_custom_call.1} parent=1 // pred_fallthru
      _
    // Predicated region
    $region58: #{tpu_custom_call.1} parent=1 // pred_check
      _
    $region59: #{tpu_custom_call.1} parent=1 // pred_check_branch
      %113 = sbr.rel (0) target = $region61
    $region60: #{tpu_custom_call.1} parent=1 // pred_region
      %114 = dma.done [#allocation6], 8192
    $region61: #{tpu_custom_call.1} parent=1 // pred_fallthru
      _
    // Predicated region
    $region62: #{tpu_custom_call.1} parent=1 // pred_check
      _
    $region63: #{tpu_custom_call.1} parent=1 // pred_check_branch
      %116 = sbr.rel (0) target = $region65
    $region64: #{tpu_custom_call.1} parent=1 // pred_region
      %117 = dma.done [#allocation9], 1024
    $region65: #{tpu_custom_call.1} parent=1 // pred_fallthru
      _
    // Predicated region
    $region66: #{tpu_custom_call.1} parent=1 // pred_check
      _
    $region67: #{tpu_custom_call.1} parent=1 // pred_check_branch
      %119 = sbr.rel (0) target = $region69
    $region68: #{tpu_custom_call.1} parent=1 // pred_region
      %120 = dma.done [#allocation9], 32768
    $region69: #{tpu_custom_call.1} parent=1 // pred_fallthru
      _
    // Predicated region
    $region70: #{tpu_custom_call.1} parent=1 // pred_check
      _
    $region71: #{tpu_custom_call.1} parent=1 // pred_check_branch
      %122 = sbr.rel (0) target = $region73
    $region72: #{tpu_custom_call.1} parent=1 // pred_region
      %123 = dma.done [#allocation12], 24576
    $region73: #{tpu_custom_call.1} parent=1 // pred_fallthru
      _
    %v124 = vld [vmem:[%s0] sm:$0xff]
    %v125 = vld [vmem:[%s0 + $0x8] sm:$0xff]
    %v126 = vld [vmem:[#allocation2] sm:$0xff]
    %v127 = vld [vmem:[#allocation2 + $0x8] sm:$0xff]
    %v128 = vld [vmem:[#allocation2 + $0x10] sm:$0xff]
    %v129 = vld [vmem:[#allocation2 + $0x18] sm:$0xff]
    %v130 = vld [vmem:[#allocation2 + $0x20] sm:$0xff]
    %v131 = vld [vmem:[#allocation2 + $0x28] sm:$0xff]
    %v132 = vld [vmem:[#allocation2 + $0x30] sm:$0xff]
    %v133 = vld [vmem:[#allocation2 + $0x38] sm:$0xff]
    %v134 = vld [vmem:[#allocation2 + $0x40] sm:$0xff]
    %v135 = vld [vmem:[#allocation2 + $0x48] sm:$0xff]
    %v136 = vld [vmem:[#allocation2 + $0x50] sm:$0xff]
    %v137 = vld [vmem:[#allocation2 + $0x58] sm:$0xff]
    %v138 = vld [vmem:[#allocation2 + $0x60] sm:$0xff]
    %v139 = vld [vmem:[#allocation2 + $0x68] sm:$0xff]
    %v140 = vld [vmem:[#allocation2 + $0x70] sm:$0xff]
    %v141 = vld [vmem:[#allocation2 + $0x78] sm:$0xff]
    %v142 = vld [vmem:[#allocation2 + $0x80] sm:$0xff]
    %v143 = vld [vmem:[#allocation2 + $0x88] sm:$0xff]
    %v144 = vld [vmem:[#allocation2 + $0x90] sm:$0xff]
    %v145 = vld [vmem:[#allocation2 + $0x98] sm:$0xff]
    %v146 = vld [vmem:[#allocation2 + $0xa0] sm:$0xff]
    %v147 = vld [vmem:[#allocation2 + $0xa8] sm:$0xff]
    %v148 = vld [vmem:[#allocation2 + $0xb0] sm:$0xff]
    %v149 = vld [vmem:[#allocation2 + $0xb8] sm:$0xff]
    %v150 = vld [vmem:[#allocation2 + $0xc0] sm:$0xff]
    %v151 = vld [vmem:[#allocation2 + $0xc8] sm:$0xff]
    %v152 = vld [vmem:[#allocation2 + $0xd0] sm:$0xff]
    %v153 = vld [vmem:[#allocation2 + $0xd8] sm:$0xff]
    %v154 = vld [vmem:[#allocation2 + $0xe0] sm:$0xff]
    %v155 = vld [vmem:[#allocation2 + $0xe8] sm:$0xff]
    %v156 = vld [vmem:[#allocation2 + $0xf0] sm:$0xff]
    %v157 = vld [vmem:[#allocation2 + $0xf8] sm:$0xff]
    %v158 = vld [vmem:[#allocation2 + $0x100] sm:$0xff]
    %v159 = vld [vmem:[#allocation2 + $0x108] sm:$0xff]
    %v160 = vld [vmem:[#allocation2 + $0x110] sm:$0xff]
    %v161 = vld [vmem:[#allocation2 + $0x118] sm:$0xff]
    %v162 = vld [vmem:[#allocation2 + $0x120] sm:$0xff]
    %v163 = vld [vmem:[#allocation2 + $0x128] sm:$0xff]
    %v164 = vld [vmem:[#allocation2 + $0x130] sm:$0xff]
    %v165 = vld [vmem:[#allocation2 + $0x138] sm:$0xff]
    %v166 = vld [vmem:[#allocation2 + $0x140] sm:$0xff]
    %v167 = vld [vmem:[#allocation2 + $0x148] sm:$0xff]
    %v168 = vld [vmem:[#allocation2 + $0x150] sm:$0xff]
    %v169 = vld [vmem:[#allocation2 + $0x158] sm:$0xff]
    %v170 = vld [vmem:[#allocation2 + $0x160] sm:$0xff]
    %v171 = vld [vmem:[#allocation2 + $0x168] sm:$0xff]
    %v172 = vld [vmem:[#allocation2 + $0x170] sm:$0xff]
    %v173 = vld [vmem:[#allocation2 + $0x178] sm:$0xff]
    %v174 = vld [vmem:[#allocation2 + $0x180] sm:$0xff]
    %v175 = vld [vmem:[#allocation2 + $0x188] sm:$0xff]
    %v176 = vld [vmem:[#allocation2 + $0x190] sm:$0xff]
    %v177 = vld [vmem:[#allocation2 + $0x198] sm:$0xff]
    %v178 = vld [vmem:[#allocation2 + $0x1a0] sm:$0xff]
    %v179 = vld [vmem:[#allocation2 + $0x1a8] sm:$0xff]
    %v180 = vld [vmem:[#allocation2 + $0x1b0] sm:$0xff]
    %v181 = vld [vmem:[#allocation2 + $0x1b8] sm:$0xff]
    %v182 = vld [vmem:[#allocation2 + $0x1c0] sm:$0xff]
    %v183 = vld [vmem:[#allocation2 + $0x1c8] sm:$0xff]
    %v184 = vld [vmem:[#allocation2 + $0x1d0] sm:$0xff]
    %v185 = vld [vmem:[#allocation2 + $0x1d8] sm:$0xff]
    %v186 = vld [vmem:[#allocation2 + $0x1e0] sm:$0xff]
    %v187 = vld [vmem:[#allocation2 + $0x1e8] sm:$0xff]
    %v188 = vld [vmem:[#allocation2 + $0x1f0] sm:$0xff]
    %v189 = vld [vmem:[#allocation2 + $0x1f8] sm:$0xff]
    %v190 = vld [vmem:[%s2] sm:$0x3]
    %v192 = vlaneseq
    %v193 = vshrl.u32 %v192, 7
    %v194 = vsub.s32 0, %v193
    %v195 = vrot.slane %v190, %v194
    %v196 = vlaneseq
    %v197 = vshrl.u32 %v196, 7
    %v198 = vsub.s32 1, %v197
    %v199 = vrot.slane %v190, %v198
    %202 = vmatprep.subr.mxu0 %v127
    %203 = vmatpush1.msra.mxu0 %v126
    %204 = vmatprep.subr.mxu0 %v129
    %205 = vmatpush1.msra.mxu0 %v128
    %206 = vmatprep.subr.mxu0 %v131
    %207 = vmatpush1.msra.mxu0 %v130
    %208 = vmatprep.subr.mxu0 %v133
    %209 = vmatpush1.msra.mxu0 %v132
    %210 = vmatprep.subr.mxu0 %v135
    %211 = vmatpush1.msra.mxu0 %v134
    %212 = vmatprep.subr.mxu0 %v137
    %213 = vmatpush1.msra.mxu0 %v136
    %214 = vmatprep.subr.mxu0 %v139
    %215 = vmatpush1.msra.mxu0 %v138
    %216 = vmatprep.subr.mxu0 %v141
    %217 = vmatpush1.msra.mxu0 %v140
    %218 = vmatprep.subr.mxu0 %v143
    %219 = vmatpush1.msra.mxu0 %v142
    %220 = vmatprep.subr.mxu0 %v145
    %221 = vmatpush1.msra.mxu0 %v144
    %222 = vmatprep.subr.mxu0 %v147
    %223 = vmatpush1.msra.mxu0 %v146
    %224 = vmatprep.subr.mxu0 %v149
    %225 = vmatpush1.msra.mxu0 %v148
    %226 = vmatprep.subr.mxu0 %v151
    %227 = vmatpush1.msra.mxu0 %v150
    %228 = vmatprep.subr.mxu0 %v153
    %229 = vmatpush1.msra.mxu0 %v152
    %230 = vmatprep.subr.mxu0 %v155
    %231 = vmatpush1.msra.mxu0 %v154
    %232 = vmatprep.subr.mxu0 %v157
    %233 = vmatpush1.msra.mxu0 %v156
    %234 = vmatprep.subr.mxu0 %v159
    %235 = vmatpush1.msra.mxu0 %v158
    %236 = vmatprep.subr.mxu0 %v161
    %237 = vmatpush1.msra.mxu0 %v160
    %238 = vmatprep.subr.mxu0 %v163
    %239 = vmatpush1.msra.mxu0 %v162
    %240 = vmatprep.subr.mxu0 %v165
    %241 = vmatpush1.msra.mxu0 %v164
    %242 = vmatprep.subr.mxu0 %v167
    %243 = vmatpush1.msra.mxu0 %v166
    %244 = vmatprep.subr.mxu0 %v169
    %245 = vmatpush1.msra.mxu0 %v168
    %246 = vmatprep.subr.mxu0 %v171
    %247 = vmatpush1.msra.mxu0 %v170
    %248 = vmatprep.subr.mxu0 %v173
    %249 = vmatpush1.msra.mxu0 %v172
    %250 = vmatprep.subr.mxu0 %v175
    %251 = vmatpush1.msra.mxu0 %v174
    %252 = vmatprep.subr.mxu0 %v177
    %253 = vmatpush1.msra.mxu0 %v176
    %254 = vmatprep.subr.mxu0 %v179
    %255 = vmatpush1.msra.mxu0 %v178
    %256 = vmatprep.subr.mxu0 %v181
    %257 = vmatpush1.msra.mxu0 %v180
    %258 = vmatprep.subr.mxu0 %v183
    %259 = vmatpush1.msra.mxu0 %v182
    %260 = vmatprep.subr.mxu0 %v185
    %261 = vmatpush1.msra.mxu0 %v184
    %262 = vmatprep.subr.mxu0 %v187
    %263 = vmatpush1.msra.mxu0 %v186
    %264 = vmatprep.subr.mxu0 %v189
    %265 = vmatpush1.msra.mxu0 %v188
    %266 = vmatprep.mubr.f32.mxu0 %v125
    %267 = vmatmul.mubr.f32.gmra.mrb[0].mxu0 %v124
    %v268 = vpop.f32.mrb[0].mxu0
    %v269 = vadd.f32 %v195, %v268
    %v270 = vpop.f32.mrb[0].mxu0
    %v271 = vadd.f32 %v199, %v270
    %272 = vdwg.mxu0
    %v273 = vld [vmem:[#allocation5] sm:$0xff]
    %v274 = vld [vmem:[%s4] sm:$0xff]
    %276 = vset.pattern.permute.xlu0 0
    %277 = vperm.xlu0 %276, %v274
    %v278 = vpop.permute.xlu0 %277
    %vm280 = vcmask 64512
    %v282 = vsel %vm280, %v273, 0
    %284 = vmatprep.subr.mxu0 %v271
    %285 = vmatpush1.msra.mxu0 %v269
    %286 = vmatprep.subr.mxu0 0.0
    %287 = vmatpush1.msra.mxu0 0.0
    %288 = vmatprep.subr.mxu0 0.0
    %289 = vmatpush1.msra.mxu0 0.0
    %290 = vmatprep.subr.mxu0 0.0
    %291 = vmatpush1.msra.mxu0 0.0
    %292 = vmatprep.subr.mxu0 0.0
    %293 = vmatpush1.msra.mxu0 0.0
    %294 = vmatprep.subr.mxu0 0.0
    %295 = vmatpush1.msra.mxu0 0.0
    %296 = vmatprep.subr.mxu0 0.0
    %297 = vmatpush1.msra.mxu0 0.0
    %298 = vmatprep.subr.mxu0 0.0
    %299 = vmatpush1.msra.mxu0 0.0
    %300 = vmatprep.subr.mxu0 0.0
    %301 = vmatpush1.msra.mxu0 0.0
    %302 = vmatprep.subr.mxu0 0.0
    %303 = vmatpush1.msra.mxu0 0.0
    %304 = vmatprep.subr.mxu0 0.0
    %305 = vmatpush1.msra.mxu0 0.0
    %306 = vmatprep.subr.mxu0 0.0
    %307 = vmatpush1.msra.mxu0 0.0
    %308 = vmatprep.subr.mxu0 0.0
    %309 = vmatpush1.msra.mxu0 0.0
    %310 = vmatprep.subr.mxu0 0.0
    %311 = vmatpush1.msra.mxu0 0.0
    %312 = vmatprep.subr.mxu0 0.0
    %313 = vmatpush1.msra.mxu0 0.0
    %314 = vmatprep.subr.mxu0 0.0
    %315 = vmatpush1.msra.mxu0 0.0
    %316 = vmatprep.subr.mxu0 0.0
    %317 = vmatpush1.msra.mxu0 0.0
    %318 = vmatprep.subr.mxu0 0.0
    %319 = vmatpush1.msra.mxu0 0.0
    %320 = vmatprep.subr.mxu0 0.0
    %321 = vmatpush1.msra.mxu0 0.0
    %322 = vmatprep.subr.mxu0 0.0
    %323 = vmatpush1.msra.mxu0 0.0
    %324 = vmatprep.subr.mxu0 0.0
    %325 = vmatpush1.msra.mxu0 0.0
    %326 = vmatprep.subr.mxu0 0.0
    %327 = vmatpush1.msra.mxu0 0.0
    %328 = vmatprep.subr.mxu0 0.0
    %329 = vmatpush1.msra.mxu0 0.0
    %330 = vmatprep.subr.mxu0 0.0
    %331 = vmatpush1.msra.mxu0 0.0
    %332 = vmatprep.subr.mxu0 0.0
    %333 = vmatpush1.msra.mxu0 0.0
    %334 = vmatprep.subr.mxu0 0.0
    %335 = vmatpush1.msra.mxu0 0.0
    %336 = vmatprep.subr.mxu0 0.0
    %337 = vmatpush1.msra.mxu0 0.0
    %338 = vmatprep.subr.mxu0 0.0
    %339 = vmatpush1.msra.mxu0 0.0
    %340 = vmatprep.subr.mxu0 0.0
    %341 = vmatpush1.msra.mxu0 0.0
    %342 = vmatprep.subr.mxu0 0.0
    %343 = vmatpush1.msra.mxu0 0.0
    %344 = vmatprep.subr.mxu0 0.0
    %345 = vmatpush1.msra.mxu0 0.0
    %346 = vmatprep.subr.mxu0 0.0
    %347 = vmatpush1.msra.mxu0 0.0
    %348 = vmatprep.mubr.f32.mxu0 0.0
    %349 = vmatmul.mubr.f32.gmra.mrb[0].mxu0 %v282
    %v350 = vpop.f32.mrb[0].mxu0
    %v351 = vadd.f32 %v278, %v350
    %v352 = vpop.f32.mrb[0].mxu0
    %v353 = vadd.f32 %v278, %v352
    %354 = vdwg.mxu0
    %v355 = vld [vmem:[#allocation7] sm:$0xff]
    %v356 = vld [vmem:[#allocation7 + $0x8] sm:$0xff]
    %v357 = vld [vmem:[#allocation7 + $0x10] sm:$0xff]
    %v358 = vld [vmem:[#allocation7 + $0x18] sm:$0xff]
    %v359 = vld [vmem:[#allocation7 + $0x20] sm:$0xff]
    %v360 = vld [vmem:[#allocation7 + $0x28] sm:$0xff]
    %v361 = vld [vmem:[#allocation7 + $0x30] sm:$0xff]
    %v362 = vld [vmem:[#allocation7 + $0x38] sm:$0xff]
    %v363 = vld [vmem:[#allocation7 + $0x40] sm:$0xff]
    %v364 = vld [vmem:[#allocation7 + $0x48] sm:$0xff]
    %v365 = vld [vmem:[#allocation7 + $0x50] sm:$0xff]
    %v366 = vld [vmem:[#allocation7 + $0x58] sm:$0xff]
    %v367 = vld [vmem:[#allocation7 + $0x60] sm:$0xff]
    %v368 = vld [vmem:[#allocation7 + $0x68] sm:$0xff]
    %v369 = vld [vmem:[#allocation7 + $0x70] sm:$0xff]
    %v370 = vld [vmem:[#allocation7 + $0x78] sm:$0xff]
    %v371 = vld [vmem:[#allocation7 + $0x80] sm:$0xff]
    %v372 = vld [vmem:[#allocation7 + $0x88] sm:$0xff]
    %v373 = vld [vmem:[#allocation7 + $0x90] sm:$0xff]
    %v374 = vld [vmem:[#allocation7 + $0x98] sm:$0xff]
    %v375 = vld [vmem:[#allocation7 + $0xa0] sm:$0xff]
    %v376 = vld [vmem:[#allocation7 + $0xa8] sm:$0xff]
    %v377 = vld [vmem:[#allocation7 + $0xb0] sm:$0xff]
    %v378 = vld [vmem:[#allocation7 + $0xb8] sm:$0xff]
    %v379 = vld [vmem:[#allocation7 + $0xc0] sm:$0xff]
    %v380 = vld [vmem:[#allocation7 + $0xc8] sm:$0xff]
    %v381 = vld [vmem:[#allocation7 + $0xd0] sm:$0xff]
    %v382 = vld [vmem:[#allocation7 + $0xd8] sm:$0xff]
    %v383 = vld [vmem:[#allocation7 + $0xe0] sm:$0xff]
    %v384 = vld [vmem:[#allocation7 + $0xe8] sm:$0xff]
    %v385 = vld [vmem:[#allocation7 + $0xf0] sm:$0xff]
    %v386 = vld [vmem:[#allocation7 + $0xf8] sm:$0xff]
    %v387 = vld [vmem:[#allocation7 + $0x100] sm:$0xff]
    %v388 = vld [vmem:[#allocation7 + $0x108] sm:$0xff]
    %v389 = vld [vmem:[#allocation7 + $0x110] sm:$0xff]
    %v390 = vld [vmem:[#allocation7 + $0x118] sm:$0xff]
    %v391 = vld [vmem:[#allocation7 + $0x120] sm:$0xff]
    %v392 = vld [vmem:[#allocation7 + $0x128] sm:$0xff]
    %v393 = vld [vmem:[#allocation7 + $0x130] sm:$0xff]
    %v394 = vld [vmem:[#allocation7 + $0x138] sm:$0xff]
    %v395 = vld [vmem:[#allocation7 + $0x140] sm:$0xff]
    %v396 = vld [vmem:[#allocation7 + $0x148] sm:$0xff]
    %v397 = vld [vmem:[#allocation7 + $0x150] sm:$0xff]
    %v398 = vld [vmem:[#allocation7 + $0x158] sm:$0xff]
    %v399 = vld [vmem:[#allocation7 + $0x160] sm:$0xff]
    %v400 = vld [vmem:[#allocation7 + $0x168] sm:$0xff]
    %v401 = vld [vmem:[#allocation7 + $0x170] sm:$0xff]
    %v402 = vld [vmem:[#allocation7 + $0x178] sm:$0xff]
    %v403 = vld [vmem:[#allocation7 + $0x180] sm:$0xff]
    %v404 = vld [vmem:[#allocation7 + $0x188] sm:$0xff]
    %v405 = vld [vmem:[#allocation7 + $0x190] sm:$0xff]
    %v406 = vld [vmem:[#allocation7 + $0x198] sm:$0xff]
    %v407 = vld [vmem:[#allocation7 + $0x1a0] sm:$0xff]
    %v408 = vld [vmem:[#allocation7 + $0x1a8] sm:$0xff]
    %v409 = vld [vmem:[#allocation7 + $0x1b0] sm:$0xff]
    %v410 = vld [vmem:[#allocation7 + $0x1b8] sm:$0xff]
    %v411 = vld [vmem:[#allocation7 + $0x1c0] sm:$0xff]
    %v412 = vld [vmem:[#allocation7 + $0x1c8] sm:$0xff]
    %v413 = vld [vmem:[#allocation7 + $0x1d0] sm:$0xff]
    %v414 = vld [vmem:[#allocation7 + $0x1d8] sm:$0xff]
    %v415 = vld [vmem:[#allocation7 + $0x1e0] sm:$0xff]
    %v416 = vld [vmem:[#allocation7 + $0x1e8] sm:$0xff]
    %v417 = vld [vmem:[#allocation7 + $0x1f0] sm:$0xff]
    %v418 = vld [vmem:[#allocation7 + $0x1f8] sm:$0xff]
    %419 = vmatprep.subr.mxu0 %v356
    %420 = vmatpush1.msra.mxu0 %v355
    %421 = vmatprep.subr.mxu0 %v358
    %422 = vmatpush1.msra.mxu0 %v357
    %423 = vmatprep.subr.mxu0 %v360
    %424 = vmatpush1.msra.mxu0 %v359
    %425 = vmatprep.subr.mxu0 %v362
    %426 = vmatpush1.msra.mxu0 %v361
    %427 = vmatprep.subr.mxu0 %v364
    %428 = vmatpush1.msra.mxu0 %v363
    %429 = vmatprep.subr.mxu0 %v366
    %430 = vmatpush1.msra.mxu0 %v365
    %431 = vmatprep.subr.mxu0 %v368
    %432 = vmatpush1.msra.mxu0 %v367
    %433 = vmatprep.subr.mxu0 %v370
    %434 = vmatpush1.msra.mxu0 %v369
    %435 = vmatprep.subr.mxu0 %v372
    %436 = vmatpush1.msra.mxu0 %v371
    %437 = vmatprep.subr.mxu0 %v374
    %438 = vmatpush1.msra.mxu0 %v373
    %439 = vmatprep.subr.mxu0 %v376
    %440 = vmatpush1.msra.mxu0 %v375
    %441 = vmatprep.subr.mxu0 %v378
    %442 = vmatpush1.msra.mxu0 %v377
    %443 = vmatprep.subr.mxu0 %v380
    %444 = vmatpush1.msra.mxu0 %v379
    %445 = vmatprep.subr.mxu0 %v382
    %446 = vmatpush1.msra.mxu0 %v381
    %447 = vmatprep.subr.mxu0 %v384
    %448 = vmatpush1.msra.mxu0 %v383
    %449 = vmatprep.subr.mxu0 %v386
    %450 = vmatpush1.msra.mxu0 %v385
    %451 = vmatprep.subr.mxu0 %v388
    %452 = vmatpush1.msra.mxu0 %v387
    %453 = vmatprep.subr.mxu0 %v390
    %454 = vmatpush1.msra.mxu0 %v389
    %455 = vmatprep.subr.mxu0 %v392
    %456 = vmatpush1.msra.mxu0 %v391
    %457 = vmatprep.subr.mxu0 %v394
    %458 = vmatpush1.msra.mxu0 %v393
    %459 = vmatprep.subr.mxu0 %v396
    %460 = vmatpush1.msra.mxu0 %v395
    %461 = vmatprep.subr.mxu0 %v398
    %462 = vmatpush1.msra.mxu0 %v397
    %463 = vmatprep.subr.mxu0 %v400
    %464 = vmatpush1.msra.mxu0 %v399
    %465 = vmatprep.subr.mxu0 %v402
    %466 = vmatpush1.msra.mxu0 %v401
    %467 = vmatprep.subr.mxu0 %v404
    %468 = vmatpush1.msra.mxu0 %v403
    %469 = vmatprep.subr.mxu0 %v406
    %470 = vmatpush1.msra.mxu0 %v405
    %471 = vmatprep.subr.mxu0 %v408
    %472 = vmatpush1.msra.mxu0 %v407
    %473 = vmatprep.subr.mxu0 %v410
    %474 = vmatpush1.msra.mxu0 %v409
    %475 = vmatprep.subr.mxu0 %v412
    %476 = vmatpush1.msra.mxu0 %v411
    %477 = vmatprep.subr.mxu0 %v414
    %478 = vmatpush1.msra.mxu0 %v413
    %479 = vmatprep.subr.mxu0 %v416
    %480 = vmatpush1.msra.mxu0 %v415
    %481 = vmatprep.subr.mxu0 %v418
    %482 = vmatpush1.msra.mxu0 %v417
    %483 = vmatprep.mubr.f32.mxu0 %v353
    %484 = vmatmul.mubr.f32.gmra.mrb[0].mxu0 %v351
    %v485 = vpop.f32.mrb[0].mxu0
    %v486 = vadd.f32 0.0, %v485
    %v487 = vpop.f32.mrb[0].mxu0
    %v488 = vadd.f32 0.0, %v487
    %489 = vdwg.mxu0
    %v490 = vsub.f32 %v351, %v486
    %v491 = vsub.f32 %v353, %v488
    %v492 = vmul.f32 %v490, %v490
    %v493 = vmul.f32 %v491, %v491
    %494 = vmatprep.subr.mxu0 %v356
    %495 = vmatpush1.msra.mxu0 %v355
    %496 = vmatprep.subr.mxu0 %v358
    %497 = vmatpush1.msra.mxu0 %v357
    %498 = vmatprep.subr.mxu0 %v360
    %499 = vmatpush1.msra.mxu0 %v359
    %500 = vmatprep.subr.mxu0 %v362
    %501 = vmatpush1.msra.mxu0 %v361
    %502 = vmatprep.subr.mxu0 %v364
    %503 = vmatpush1.msra.mxu0 %v363
    %504 = vmatprep.subr.mxu0 %v366
    %505 = vmatpush1.msra.mxu0 %v365
    %506 = vmatprep.subr.mxu0 %v368
    %507 = vmatpush1.msra.mxu0 %v367
    %508 = vmatprep.subr.mxu0 %v370
    %509 = vmatpush1.msra.mxu0 %v369
    %510 = vmatprep.subr.mxu0 %v372
    %511 = vmatpush1.msra.mxu0 %v371
    %512 = vmatprep.subr.mxu0 %v374
    %513 = vmatpush1.msra.mxu0 %v373
    %514 = vmatprep.subr.mxu0 %v376
    %515 = vmatpush1.msra.mxu0 %v375
    %516 = vmatprep.subr.mxu0 %v378
    %517 = vmatpush1.msra.mxu0 %v377
    %518 = vmatprep.subr.mxu0 %v380
    %519 = vmatpush1.msra.mxu0 %v379
    %520 = vmatprep.subr.mxu0 %v382
    %521 = vmatpush1.msra.mxu0 %v381
    %522 = vmatprep.subr.mxu0 %v384
    %523 = vmatpush1.msra.mxu0 %v383
    %524 = vmatprep.subr.mxu0 %v386
    %525 = vmatpush1.msra.mxu0 %v385
    %526 = vmatprep.subr.mxu0 %v388
    %527 = vmatpush1.msra.mxu0 %v387
    %528 = vmatprep.subr.mxu0 %v390
    %529 = vmatpush1.msra.mxu0 %v389
    %530 = vmatprep.subr.mxu0 %v392
    %531 = vmatpush1.msra.mxu0 %v391
    %532 = vmatprep.subr.mxu0 %v394
    %533 = vmatpush1.msra.mxu0 %v393
    %534 = vmatprep.subr.mxu0 %v396
    %535 = vmatpush1.msra.mxu0 %v395
    %536 = vmatprep.subr.mxu0 %v398
    %537 = vmatpush1.msra.mxu0 %v397
    %538 = vmatprep.subr.mxu0 %v400
    %539 = vmatpush1.msra.mxu0 %v399
    %540 = vmatprep.subr.mxu0 %v402
    %541 = vmatpush1.msra.mxu0 %v401
    %542 = vmatprep.subr.mxu0 %v404
    %543 = vmatpush1.msra.mxu0 %v403
    %544 = vmatprep.subr.mxu0 %v406
    %545 = vmatpush1.msra.mxu0 %v405
    %546 = vmatprep.subr.mxu0 %v408
    %547 = vmatpush1.msra.mxu0 %v407
    %548 = vmatprep.subr.mxu0 %v410
    %549 = vmatpush1.msra.mxu0 %v409
    %550 = vmatprep.subr.mxu0 %v412
    %551 = vmatpush1.msra.mxu0 %v411
    %552 = vmatprep.subr.mxu0 %v414
    %553 = vmatpush1.msra.mxu0 %v413
    %554 = vmatprep.subr.mxu0 %v416
    %555 = vmatpush1.msra.mxu0 %v415
    %556 = vmatprep.subr.mxu0 %v418
    %557 = vmatpush1.msra.mxu0 %v417
    %558 = vmatprep.mubr.f32.mxu0 %v493
    %559 = vmatmul.mubr.f32.gmra.mrb[0].mxu0 %v492
    %v560 = vpop.f32.mrb[0].mxu0
    %v561 = vadd.f32 1e-05, %v560
    %v562 = vpop.f32.mrb[0].mxu0
    %v563 = vadd.f32 1e-05, %v562
    %564 = vdwg.mxu0
    %v565 = vrsqrt.pop %v561
    %v566 = vrsqrt.pop %v563
    %v567 = vmul.f32 %v490, %v565
    %v568 = vmul.f32 %v491, %v566
    %v569 = vld [vmem:[%s6] sm:$0x3]
    %v571 = vlaneseq
    %v572 = vshrl.u32 %v571, 7
    %v573 = vsub.s32 0, %v572
    %v574 = vrot.slane %v569, %v573
    %v575 = vlaneseq
    %v576 = vshrl.u32 %v575, 7
    %v577 = vsub.s32 1, %v576
    %v578 = vrot.slane %v569, %v577
    %v581 = vmul.f32 %v567, %v574
    %v582 = vmul.f32 %v568, %v578
    %v583 = vld [vmem:[%s7] sm:$0x3]
    %v585 = vlaneseq
    %v586 = vshrl.u32 %v585, 7
    %v587 = vsub.s32 0, %v586
    %v588 = vrot.slane %v583, %v587
    %v589 = vlaneseq
    %v590 = vshrl.u32 %v589, 7
    %v591 = vsub.s32 1, %v590
    %v592 = vrot.slane %v583, %v591
    %v595 = vadd.f32 %v581, %v588
    %v596 = vadd.f32 %v582, %v592
    %v597 = vld [vmem:[#allocation10] sm:$0xff]
    %v598 = vld [vmem:[#allocation10 + $0x8] sm:$0xff]
    %v599 = vld [vmem:[#allocation10 + $0x10] sm:$0xff]
    %v600 = vld [vmem:[#allocation10 + $0x18] sm:$0xff]
    %v601 = vld [vmem:[#allocation10 + $0x20] sm:$0xff]
    %v602 = vld [vmem:[#allocation10 + $0x28] sm:$0xff]
    %v603 = vld [vmem:[#allocation10 + $0x30] sm:$0xff]
    %v604 = vld [vmem:[#allocation10 + $0x38] sm:$0xff]
    %v605 = vld [vmem:[#allocation10 + $0x40] sm:$0xff]
    %v606 = vld [vmem:[#allocation10 + $0x48] sm:$0xff]
    %v607 = vld [vmem:[#allocation10 + $0x50] sm:$0xff]
    %v608 = vld [vmem:[#allocation10 + $0x58] sm:$0xff]
    %v609 = vld [vmem:[#allocation10 + $0x60] sm:$0xff]
    %v610 = vld [vmem:[#allocation10 + $0x68] sm:$0xff]
    %v611 = vld [vmem:[#allocation10 + $0x70] sm:$0xff]
    %v612 = vld [vmem:[#allocation10 + $0x78] sm:$0xff]
    %v613 = vld [vmem:[#allocation10 + $0x80] sm:$0xff]
    %v614 = vld [vmem:[#allocation10 + $0x88] sm:$0xff]
    %v615 = vld [vmem:[#allocation10 + $0x90] sm:$0xff]
    %v616 = vld [vmem:[#allocation10 + $0x98] sm:$0xff]
    %v617 = vld [vmem:[#allocation10 + $0xa0] sm:$0xff]
    %v618 = vld [vmem:[#allocation10 + $0xa8] sm:$0xff]
    %v619 = vld [vmem:[#allocation10 + $0xb0] sm:$0xff]
    %v620 = vld [vmem:[#allocation10 + $0xb8] sm:$0xff]
    %v621 = vld [vmem:[#allocation10 + $0xc0] sm:$0xff]
    %v622 = vld [vmem:[#allocation10 + $0xc8] sm:$0xff]
    %v623 = vld [vmem:[#allocation10 + $0xd0] sm:$0xff]
    %v624 = vld [vmem:[#allocation10 + $0xd8] sm:$0xff]
    %v625 = vld [vmem:[#allocation10 + $0xe0] sm:$0xff]
    %v626 = vld [vmem:[#allocation10 + $0xe8] sm:$0xff]
    %v627 = vld [vmem:[#allocation10 + $0xf0] sm:$0xff]
    %v628 = vld [vmem:[#allocation10 + $0xf8] sm:$0xff]
    %v629 = vld [vmem:[#allocation10 + $0x100] sm:$0xff]
    %v630 = vld [vmem:[#allocation10 + $0x108] sm:$0xff]
    %v631 = vld [vmem:[#allocation10 + $0x110] sm:$0xff]
    %v632 = vld [vmem:[#allocation10 + $0x118] sm:$0xff]
    %v633 = vld [vmem:[#allocation10 + $0x120] sm:$0xff]
    %v634 = vld [vmem:[#allocation10 + $0x128] sm:$0xff]
    %v635 = vld [vmem:[#allocation10 + $0x130] sm:$0xff]
    %v636 = vld [vmem:[#allocation10 + $0x138] sm:$0xff]
    %v637 = vld [vmem:[#allocation10 + $0x140] sm:$0xff]
    %v638 = vld [vmem:[#allocation10 + $0x148] sm:$0xff]
    %v639 = vld [vmem:[#allocation10 + $0x150] sm:$0xff]
    %v640 = vld [vmem:[#allocation10 + $0x158] sm:$0xff]
    %v641 = vld [vmem:[#allocation10 + $0x160] sm:$0xff]
    %v642 = vld [vmem:[#allocation10 + $0x168] sm:$0xff]
    %v643 = vld [vmem:[#allocation10 + $0x170] sm:$0xff]
    %v644 = vld [vmem:[#allocation10 + $0x178] sm:$0xff]
    %v645 = vld [vmem:[#allocation10 + $0x180] sm:$0xff]
    %v646 = vld [vmem:[#allocation10 + $0x188] sm:$0xff]
    %v647 = vld [vmem:[#allocation10 + $0x190] sm:$0xff]
    %v648 = vld [vmem:[#allocation10 + $0x198] sm:$0xff]
    %v649 = vld [vmem:[#allocation10 + $0x1a0] sm:$0xff]
    %v650 = vld [vmem:[#allocation10 + $0x1a8] sm:$0xff]
    %v651 = vld [vmem:[#allocation10 + $0x1b0] sm:$0xff]
    %v652 = vld [vmem:[#allocation10 + $0x1b8] sm:$0xff]
    %v653 = vld [vmem:[#allocation10 + $0x1c0] sm:$0xff]
    %v654 = vld [vmem:[#allocation10 + $0x1c8] sm:$0xff]
    %v655 = vld [vmem:[#allocation10 + $0x1d0] sm:$0xff]
    %v656 = vld [vmem:[#allocation10 + $0x1d8] sm:$0xff]
    %v657 = vld [vmem:[#allocation10 + $0x1e0] sm:$0xff]
    %v658 = vld [vmem:[#allocation10 + $0x1e8] sm:$0xff]
    %v659 = vld [vmem:[#allocation10 + $0x1f0] sm:$0xff]
    %v660 = vld [vmem:[#allocation10 + $0x1f8] sm:$0xff]
    %661 = vmatprep.subr.mxu0 %v598
    %662 = vmatpush1.msra.mxu0 %v597
    %663 = vmatprep.subr.mxu0 %v600
    %664 = vmatpush1.msra.mxu0 %v599
    %665 = vmatprep.subr.mxu0 %v602
    %666 = vmatpush1.msra.mxu0 %v601
    %667 = vmatprep.subr.mxu0 %v604
    %668 = vmatpush1.msra.mxu0 %v603
    %669 = vmatprep.subr.mxu0 %v606
    %670 = vmatpush1.msra.mxu0 %v605
    %671 = vmatprep.subr.mxu0 %v608
    %672 = vmatpush1.msra.mxu0 %v607
    %673 = vmatprep.subr.mxu0 %v610
    %674 = vmatpush1.msra.mxu0 %v609
    %675 = vmatprep.subr.mxu0 %v612
    %676 = vmatpush1.msra.mxu0 %v611
    %677 = vmatprep.subr.mxu0 %v614
    %678 = vmatpush1.msra.mxu0 %v613
    %679 = vmatprep.subr.mxu0 %v616
    %680 = vmatpush1.msra.mxu0 %v615
    %681 = vmatprep.subr.mxu0 %v618
    %682 = vmatpush1.msra.mxu0 %v617
    %683 = vmatprep.subr.mxu0 %v620
    %684 = vmatpush1.msra.mxu0 %v619
    %685 = vmatprep.subr.mxu0 %v622
    %686 = vmatpush1.msra.mxu0 %v621
    %687 = vmatprep.subr.mxu0 %v624
    %688 = vmatpush1.msra.mxu0 %v623
    %689 = vmatprep.subr.mxu0 %v626
    %690 = vmatpush1.msra.mxu0 %v625
    %691 = vmatprep.subr.mxu0 %v628
    %692 = vmatpush1.msra.mxu0 %v627
    %693 = vmatprep.subr.mxu0 %v630
    %694 = vmatpush1.msra.mxu0 %v629
    %695 = vmatprep.subr.mxu0 %v632
    %696 = vmatpush1.msra.mxu0 %v631
    %697 = vmatprep.subr.mxu0 %v634
    %698 = vmatpush1.msra.mxu0 %v633
    %699 = vmatprep.subr.mxu0 %v636
    %700 = vmatpush1.msra.mxu0 %v635
    %701 = vmatprep.subr.mxu0 %v638
    %702 = vmatpush1.msra.mxu0 %v637
    %703 = vmatprep.subr.mxu0 %v640
    %704 = vmatpush1.msra.mxu0 %v639
    %705 = vmatprep.subr.mxu0 %v642
    %706 = vmatpush1.msra.mxu0 %v641
    %707 = vmatprep.subr.mxu0 %v644
    %708 = vmatpush1.msra.mxu0 %v643
    %709 = vmatprep.subr.mxu0 %v646
    %710 = vmatpush1.msra.mxu0 %v645
    %711 = vmatprep.subr.mxu0 %v648
    %712 = vmatpush1.msra.mxu0 %v647
    %713 = vmatprep.subr.mxu0 %v650
    %714 = vmatpush1.msra.mxu0 %v649
    %715 = vmatprep.subr.mxu0 %v652
    %716 = vmatpush1.msra.mxu0 %v651
    %717 = vmatprep.subr.mxu0 %v654
    %718 = vmatpush1.msra.mxu0 %v653
    %719 = vmatprep.subr.mxu0 %v656
    %720 = vmatpush1.msra.mxu0 %v655
    %721 = vmatprep.subr.mxu0 %v658
    %722 = vmatpush1.msra.mxu0 %v657
    %723 = vmatprep.subr.mxu0 %v660
    %724 = vmatpush1.msra.mxu0 %v659
    %725 = vmatprep.mubr.f32.mxu0 %v271
    %726 = vmatmul.mubr.f32.gmra.mrb[0].mxu0 %v269
    %v727 = vpop.f32.mrb[0].mxu0
    %v728 = vadd.f32 0.0, %v727
    %v729 = vpop.f32.mrb[0].mxu0
    %v730 = vadd.f32 0.0, %v729
    %731 = vdwg.mxu0
    %v732 = vld [vmem:[#allocation8] sm:$0xff]
    %v733 = vld [vmem:[#allocation8 + $0x8] sm:$0xff]
    %v734 = vmul.f32 %v732, %v728
    %v735 = vmul.f32 %v733, %v730
    %v736 = vadd.f32 %v734, 0.0
    %v737 = vadd.f32 %v735, 0.0
    %s738 = scalar_lea.vmem [#allocation10], 512
    %v739 = vld [vmem:[%s738] sm:$0xff]
    %v740 = vld [vmem:[%s738 + $0x8] sm:$0xff]
    %v741 = vld [vmem:[%s738 + $0x10] sm:$0xff]
    %v742 = vld [vmem:[%s738 + $0x18] sm:$0xff]
    %v743 = vld [vmem:[%s738 + $0x20] sm:$0xff]
    %v744 = vld [vmem:[%s738 + $0x28] sm:$0xff]
    %v745 = vld [vmem:[%s738 + $0x30] sm:$0xff]
    %v746 = vld [vmem:[%s738 + $0x38] sm:$0xff]
    %v747 = vld [vmem:[%s738 + $0x40] sm:$0xff]
    %v748 = vld [vmem:[%s738 + $0x48] sm:$0xff]
    %v749 = vld [vmem:[%s738 + $0x50] sm:$0xff]
    %v750 = vld [vmem:[%s738 + $0x58] sm:$0xff]
    %v751 = vld [vmem:[%s738 + $0x60] sm:$0xff]
    %v752 = vld [vmem:[%s738 + $0x68] sm:$0xff]
    %v753 = vld [vmem:[%s738 + $0x70] sm:$0xff]
    %v754 = vld [vmem:[%s738 + $0x78] sm:$0xff]
    %v755 = vld [vmem:[%s738 + $0x80] sm:$0xff]
    %v756 = vld [vmem:[%s738 + $0x88] sm:$0xff]
    %v757 = vld [vmem:[%s738 + $0x90] sm:$0xff]
    %v758 = vld [vmem:[%s738 + $0x98] sm:$0xff]
    %v759 = vld [vmem:[%s738 + $0xa0] sm:$0xff]
    %v760 = vld [vmem:[%s738 + $0xa8] sm:$0xff]
    %v761 = vld [vmem:[%s738 + $0xb0] sm:$0xff]
    %v762 = vld [vmem:[%s738 + $0xb8] sm:$0xff]
    %v763 = vld [vmem:[%s738 + $0xc0] sm:$0xff]
    %v764 = vld [vmem:[%s738 + $0xc8] sm:$0xff]
    %v765 = vld [vmem:[%s738 + $0xd0] sm:$0xff]
    %v766 = vld [vmem:[%s738 + $0xd8] sm:$0xff]
    %v767 = vld [vmem:[%s738 + $0xe0] sm:$0xff]
    %v768 = vld [vmem:[%s738 + $0xe8] sm:$0xff]
    %v769 = vld [vmem:[%s738 + $0xf0] sm:$0xff]
    %v770 = vld [vmem:[%s738 + $0xf8] sm:$0xff]
    %v771 = vld [vmem:[%s738 + $0x100] sm:$0xff]
    %v772 = vld [vmem:[%s738 + $0x108] sm:$0xff]
    %v773 = vld [vmem:[%s738 + $0x110] sm:$0xff]
    %v774 = vld [vmem:[%s738 + $0x118] sm:$0xff]
    %v775 = vld [vmem:[%s738 + $0x120] sm:$0xff]
    %v776 = vld [vmem:[%s738 + $0x128] sm:$0xff]
    %v777 = vld [vmem:[%s738 + $0x130] sm:$0xff]
    %v778 = vld [vmem:[%s738 + $0x138] sm:$0xff]
    %v779 = vld [vmem:[%s738 + $0x140] sm:$0xff]
    %v780 = vld [vmem:[%s738 + $0x148] sm:$0xff]
    %v781 = vld [vmem:[%s738 + $0x150] sm:$0xff]
    %v782 = vld [vmem:[%s738 + $0x158] sm:$0xff]
    %v783 = vld [vmem:[%s738 + $0x160] sm:$0xff]
    %v784 = vld [vmem:[%s738 + $0x168] sm:$0xff]
    %v785 = vld [vmem:[%s738 + $0x170] sm:$0xff]
    %v786 = vld [vmem:[%s738 + $0x178] sm:$0xff]
    %v787 = vld [vmem:[%s738 + $0x180] sm:$0xff]
    %v788 = vld [vmem:[%s738 + $0x188] sm:$0xff]
    %v789 = vld [vmem:[%s738 + $0x190] sm:$0xff]
    %v790 = vld [vmem:[%s738 + $0x198] sm:$0xff]
    %v791 = vld [vmem:[%s738 + $0x1a0] sm:$0xff]
    %v792 = vld [vmem:[%s738 + $0x1a8] sm:$0xff]
    %v793 = vld [vmem:[%s738 + $0x1b0] sm:$0xff]
    %v794 = vld [vmem:[%s738 + $0x1b8] sm:$0xff]
    %v795 = vld [vmem:[%s738 + $0x1c0] sm:$0xff]
    %v796 = vld [vmem:[%s738 + $0x1c8] sm:$0xff]
    %v797 = vld [vmem:[%s738 + $0x1d0] sm:$0xff]
    %v798 = vld [vmem:[%s738 + $0x1d8] sm:$0xff]
    %v799 = vld [vmem:[%s738 + $0x1e0] sm:$0xff]
    %v800 = vld [vmem:[%s738 + $0x1e8] sm:$0xff]
    %v801 = vld [vmem:[%s738 + $0x1f0] sm:$0xff]
    %v802 = vld [vmem:[%s738 + $0x1f8] sm:$0xff]
    %803 = vmatprep.subr.mxu0 %v740
    %804 = vmatpush1.msra.mxu0 %v739
    %805 = vmatprep.subr.mxu0 %v742
    %806 = vmatpush1.msra.mxu0 %v741
    %807 = vmatprep.subr.mxu0 %v744
    %808 = vmatpush1.msra.mxu0 %v743
    %809 = vmatprep.subr.mxu0 %v746
    %810 = vmatpush1.msra.mxu0 %v745
    %811 = vmatprep.subr.mxu0 %v748
    %812 = vmatpush1.msra.mxu0 %v747
    %813 = vmatprep.subr.mxu0 %v750
    %814 = vmatpush1.msra.mxu0 %v749
    %815 = vmatprep.subr.mxu0 %v752
    %816 = vmatpush1.msra.mxu0 %v751
    %817 = vmatprep.subr.mxu0 %v754
    %818 = vmatpush1.msra.mxu0 %v753
    %819 = vmatprep.subr.mxu0 %v756
    %820 = vmatpush1.msra.mxu0 %v755
    %821 = vmatprep.subr.mxu0 %v758
    %822 = vmatpush1.msra.mxu0 %v757
    %823 = vmatprep.subr.mxu0 %v760
    %824 = vmatpush1.msra.mxu0 %v759
    %825 = vmatprep.subr.mxu0 %v762
    %826 = vmatpush1.msra.mxu0 %v761
    %827 = vmatprep.subr.mxu0 %v764
    %828 = vmatpush1.msra.mxu0 %v763
    %829 = vmatprep.subr.mxu0 %v766
    %830 = vmatpush1.msra.mxu0 %v765
    %831 = vmatprep.subr.mxu0 %v768
    %832 = vmatpush1.msra.mxu0 %v767
    %833 = vmatprep.subr.mxu0 %v770
    %834 = vmatpush1.msra.mxu0 %v769
    %835 = vmatprep.subr.mxu0 %v772
    %836 = vmatpush1.msra.mxu0 %v771
    %837 = vmatprep.subr.mxu0 %v774
    %838 = vmatpush1.msra.mxu0 %v773
    %839 = vmatprep.subr.mxu0 %v776
    %840 = vmatpush1.msra.mxu0 %v775
    %841 = vmatprep.subr.mxu0 %v778
    %842 = vmatpush1.msra.mxu0 %v777
    %843 = vmatprep.subr.mxu0 %v780
    %844 = vmatpush1.msra.mxu0 %v779
    %845 = vmatprep.subr.mxu0 %v782
    %846 = vmatpush1.msra.mxu0 %v781
    %847 = vmatprep.subr.mxu0 %v784
    %848 = vmatpush1.msra.mxu0 %v783
    %849 = vmatprep.subr.mxu0 %v786
    %850 = vmatpush1.msra.mxu0 %v785
    %851 = vmatprep.subr.mxu0 %v788
    %852 = vmatpush1.msra.mxu0 %v787
    %853 = vmatprep.subr.mxu0 %v790
    %854 = vmatpush1.msra.mxu0 %v789
    %855 = vmatprep.subr.mxu0 %v792
    %856 = vmatpush1.msra.mxu0 %v791
    %857 = vmatprep.subr.mxu0 %v794
    %858 = vmatpush1.msra.mxu0 %v793
    %859 = vmatprep.subr.mxu0 %v796
    %860 = vmatpush1.msra.mxu0 %v795
    %861 = vmatprep.subr.mxu0 %v798
    %862 = vmatpush1.msra.mxu0 %v797
    %863 = vmatprep.subr.mxu0 %v800
    %864 = vmatpush1.msra.mxu0 %v799
    %865 = vmatprep.subr.mxu0 %v802
    %866 = vmatpush1.msra.mxu0 %v801
    %867 = vmatprep.mubr.f32.mxu0 %v271
    %868 = vmatmul.mubr.f32.gmra.mrb[0].mxu0 %v269
    %v869 = vpop.f32.mrb[0].mxu0
    %v870 = vadd.f32 0.0, %v869
    %v871 = vpop.f32.mrb[0].mxu0
    %v872 = vadd.f32 0.0, %v871
    %873 = vdwg.mxu0
    %s874 = scalar_lea.vmem [#allocation8], 16
    %v875 = vld [vmem:[%s874] sm:$0xff]
    %v876 = vld [vmem:[%s874 + $0x8] sm:$0xff]
    %v877 = vmul.f32 %v875, %v870
    %v878 = vmul.f32 %v876, %v872
    %v879 = vadd.f32 %v736, %v877
    %v880 = vadd.f32 %v737, %v878
    %s881 = scalar_lea.vmem [#allocation10], 1024
    %v882 = vld [vmem:[%s881] sm:$0xff]
    %v883 = vld [vmem:[%s881 + $0x8] sm:$0xff]
    %v884 = vld [vmem:[%s881 + $0x10] sm:$0xff]
    %v885 = vld [vmem:[%s881 + $0x18] sm:$0xff]
    %v886 = vld [vmem:[%s881 + $0x20] sm:$0xff]
    %v887 = vld [vmem:[%s881 + $0x28] sm:$0xff]
    %v888 = vld [vmem:[%s881 + $0x30] sm:$0xff]
    %v889 = vld [vmem:[%s881 + $0x38] sm:$0xff]
    %v890 = vld [vmem:[%s881 + $0x40] sm:$0xff]
    %v891 = vld [vmem:[%s881 + $0x48] sm:$0xff]
    %v892 = vld [vmem:[%s881 + $0x50] sm:$0xff]
    %v893 = vld [vmem:[%s881 + $0x58] sm:$0xff]
    %v894 = vld [vmem:[%s881 + $0x60] sm:$0xff]
    %v895 = vld [vmem:[%s881 + $0x68] sm:$0xff]
    %v896 = vld [vmem:[%s881 + $0x70] sm:$0xff]
    %v897 = vld [vmem:[%s881 + $0x78] sm:$0xff]
    %v898 = vld [vmem:[%s881 + $0x80] sm:$0xff]
    %v899 = vld [vmem:[%s881 + $0x88] sm:$0xff]
    %v900 = vld [vmem:[%s881 + $0x90] sm:$0xff]
    %v901 = vld [vmem:[%s881 + $0x98] sm:$0xff]
    %v902 = vld [vmem:[%s881 + $0xa0] sm:$0xff]
    %v903 = vld [vmem:[%s881 + $0xa8] sm:$0xff]
    %v904 = vld [vmem:[%s881 + $0xb0] sm:$0xff]
    %v905 = vld [vmem:[%s881 + $0xb8] sm:$0xff]
    %v906 = vld [vmem:[%s881 + $0xc0] sm:$0xff]
    %v907 = vld [vmem:[%s881 + $0xc8] sm:$0xff]
    %v908 = vld [vmem:[%s881 + $0xd0] sm:$0xff]
    %v909 = vld [vmem:[%s881 + $0xd8] sm:$0xff]
    %v910 = vld [vmem:[%s881 + $0xe0] sm:$0xff]
    %v911 = vld [vmem:[%s881 + $0xe8] sm:$0xff]
    %v912 = vld [vmem:[%s881 + $0xf0] sm:$0xff]
    %v913 = vld [vmem:[%s881 + $0xf8] sm:$0xff]
    %v914 = vld [vmem:[%s881 + $0x100] sm:$0xff]
    %v915 = vld [vmem:[%s881 + $0x108] sm:$0xff]
    %v916 = vld [vmem:[%s881 + $0x110] sm:$0xff]
    %v917 = vld [vmem:[%s881 + $0x118] sm:$0xff]
    %v918 = vld [vmem:[%s881 + $0x120] sm:$0xff]
    %v919 = vld [vmem:[%s881 + $0x128] sm:$0xff]
    %v920 = vld [vmem:[%s881 + $0x130] sm:$0xff]
    %v921 = vld [vmem:[%s881 + $0x138] sm:$0xff]
    %v922 = vld [vmem:[%s881 + $0x140] sm:$0xff]
    %v923 = vld [vmem:[%s881 + $0x148] sm:$0xff]
    %v924 = vld [vmem:[%s881 + $0x150] sm:$0xff]
    %v925 = vld [vmem:[%s881 + $0x158] sm:$0xff]
    %v926 = vld [vmem:[%s881 + $0x160] sm:$0xff]
    %v927 = vld [vmem:[%s881 + $0x168] sm:$0xff]
    %v928 = vld [vmem:[%s881 + $0x170] sm:$0xff]
    %v929 = vld [vmem:[%s881 + $0x178] sm:$0xff]
    %v930 = vld [vmem:[%s881 + $0x180] sm:$0xff]
    %v931 = vld [vmem:[%s881 + $0x188] sm:$0xff]
    %v932 = vld [vmem:[%s881 + $0x190] sm:$0xff]
    %v933 = vld [vmem:[%s881 + $0x198] sm:$0xff]
    %v934 = vld [vmem:[%s881 + $0x1a0] sm:$0xff]
    %v935 = vld [vmem:[%s881 + $0x1a8] sm:$0xff]
    %v936 = vld [vmem:[%s881 + $0x1b0] sm:$0xff]
    %v937 = vld [vmem:[%s881 + $0x1b8] sm:$0xff]
    %v938 = vld [vmem:[%s881 + $0x1c0] sm:$0xff]
    %v939 = vld [vmem:[%s881 + $0x1c8] sm:$0xff]
    %v940 = vld [vmem:[%s881 + $0x1d0] sm:$0xff]
    %v941 = vld [vmem:[%s881 + $0x1d8] sm:$0xff]
    %v942 = vld [vmem:[%s881 + $0x1e0] sm:$0xff]
    %v943 = vld [vmem:[%s881 + $0x1e8] sm:$0xff]
    %v944 = vld [vmem:[%s881 + $0x1f0] sm:$0xff]
    %v945 = vld [vmem:[%s881 + $0x1f8] sm:$0xff]
    %946 = vmatprep.subr.mxu0 %v883
    %947 = vmatpush1.msra.mxu0 %v882
    %948 = vmatprep.subr.mxu0 %v885
    %949 = vmatpush1.msra.mxu0 %v884
    %950 = vmatprep.subr.mxu0 %v887
    %951 = vmatpush1.msra.mxu0 %v886
    %952 = vmatprep.subr.mxu0 %v889
    %953 = vmatpush1.msra.mxu0 %v888
    %954 = vmatprep.subr.mxu0 %v891
    %955 = vmatpush1.msra.mxu0 %v890
    %956 = vmatprep.subr.mxu0 %v893
    %957 = vmatpush1.msra.mxu0 %v892
    %958 = vmatprep.subr.mxu0 %v895
    %959 = vmatpush1.msra.mxu0 %v894
    %960 = vmatprep.subr.mxu0 %v897
    %961 = vmatpush1.msra.mxu0 %v896
    %962 = vmatprep.subr.mxu0 %v899
    %963 = vmatpush1.msra.mxu0 %v898
    %964 = vmatprep.subr.mxu0 %v901
    %965 = vmatpush1.msra.mxu0 %v900
    %966 = vmatprep.subr.mxu0 %v903
    %967 = vmatpush1.msra.mxu0 %v902
    %968 = vmatprep.subr.mxu0 %v905
    %969 = vmatpush1.msra.mxu0 %v904
    %970 = vmatprep.subr.mxu0 %v907
    %971 = vmatpush1.msra.mxu0 %v906
    %972 = vmatprep.subr.mxu0 %v909
    %973 = vmatpush1.msra.mxu0 %v908
    %974 = vmatprep.subr.mxu0 %v911
    %975 = vmatpush1.msra.mxu0 %v910
    %976 = vmatprep.subr.mxu0 %v913
    %977 = vmatpush1.msra.mxu0 %v912
    %978 = vmatprep.subr.mxu0 %v915
    %979 = vmatpush1.msra.mxu0 %v914
    %980 = vmatprep.subr.mxu0 %v917
    %981 = vmatpush1.msra.mxu0 %v916
    %982 = vmatprep.subr.mxu0 %v919
    %983 = vmatpush1.msra.mxu0 %v918
    %984 = vmatprep.subr.mxu0 %v921
    %985 = vmatpush1.msra.mxu0 %v920
    %986 = vmatprep.subr.mxu0 %v923
    %987 = vmatpush1.msra.mxu0 %v922
    %988 = vmatprep.subr.mxu0 %v925
    %989 = vmatpush1.msra.mxu0 %v924
    %990 = vmatprep.subr.mxu0 %v927
    %991 = vmatpush1.msra.mxu0 %v926
    %992 = vmatprep.subr.mxu0 %v929
    %993 = vmatpush1.msra.mxu0 %v928
    %994 = vmatprep.subr.mxu0 %v931
    %995 = vmatpush1.msra.mxu0 %v930
    %996 = vmatprep.subr.mxu0 %v933
    %997 = vmatpush1.msra.mxu0 %v932
    %998 = vmatprep.subr.mxu0 %v935
    %999 = vmatpush1.msra.mxu0 %v934
    %1000 = vmatprep.subr.mxu0 %v937
    %1001 = vmatpush1.msra.mxu0 %v936
    %1002 = vmatprep.subr.mxu0 %v939
    %1003 = vmatpush1.msra.mxu0 %v938
    %1004 = vmatprep.subr.mxu0 %v941
    %1005 = vmatpush1.msra.mxu0 %v940
    %1006 = vmatprep.subr.mxu0 %v943
    %1007 = vmatpush1.msra.mxu0 %v942
    %1008 = vmatprep.subr.mxu0 %v945
    %1009 = vmatpush1.msra.mxu0 %v944
    %1010 = vmatprep.mubr.f32.mxu0 %v271
    %1011 = vmatmul.mubr.f32.gmra.mrb[0].mxu0 %v269
    %v1012 = vpop.f32.mrb[0].mxu0
    %v1013 = vadd.f32 0.0, %v1012
    %v1014 = vpop.f32.mrb[0].mxu0
    %v1015 = vadd.f32 0.0, %v1014
    %1016 = vdwg.mxu0
    %s1017 = scalar_lea.vmem [#allocation8], 32
    %v1018 = vld [vmem:[%s1017] sm:$0xff]
    %v1019 = vld [vmem:[%s1017 + $0x8] sm:$0xff]
    %v1020 = vmul.f32 %v1018, %v1013
    %v1021 = vmul.f32 %v1019, %v1015
    %v1022 = vadd.f32 %v879, %v1020
    %v1023 = vadd.f32 %v880, %v1021
    %s1024 = scalar_lea.vmem [#allocation10], 1536
    %v1025 = vld [vmem:[%s1024] sm:$0xff]
    %v1026 = vld [vmem:[%s1024 + $0x8] sm:$0xff]
    %v1027 = vld [vmem:[%s1024 + $0x10] sm:$0xff]
    %v1028 = vld [vmem:[%s1024 + $0x18] sm:$0xff]
    %v1029 = vld [vmem:[%s1024 + $0x20] sm:$0xff]
    %v1030 = vld [vmem:[%s1024 + $0x28] sm:$0xff]
    %v1031 = vld [vmem:[%s1024 + $0x30] sm:$0xff]
    %v1032 = vld [vmem:[%s1024 + $0x38] sm:$0xff]
    %v1033 = vld [vmem:[%s1024 + $0x40] sm:$0xff]
    %v1034 = vld [vmem:[%s1024 + $0x48] sm:$0xff]
    %v1035 = vld [vmem:[%s1024 + $0x50] sm:$0xff]
    %v1036 = vld [vmem:[%s1024 + $0x58] sm:$0xff]
    %v1037 = vld [vmem:[%s1024 + $0x60] sm:$0xff]
    %v1038 = vld [vmem:[%s1024 + $0x68] sm:$0xff]
    %v1039 = vld [vmem:[%s1024 + $0x70] sm:$0xff]
    %v1040 = vld [vmem:[%s1024 + $0x78] sm:$0xff]
    %v1041 = vld [vmem:[%s1024 + $0x80] sm:$0xff]
    %v1042 = vld [vmem:[%s1024 + $0x88] sm:$0xff]
    %v1043 = vld [vmem:[%s1024 + $0x90] sm:$0xff]
    %v1044 = vld [vmem:[%s1024 + $0x98] sm:$0xff]
    %v1045 = vld [vmem:[%s1024 + $0xa0] sm:$0xff]
    %v1046 = vld [vmem:[%s1024 + $0xa8] sm:$0xff]
    %v1047 = vld [vmem:[%s1024 + $0xb0] sm:$0xff]
    %v1048 = vld [vmem:[%s1024 + $0xb8] sm:$0xff]
    %v1049 = vld [vmem:[%s1024 + $0xc0] sm:$0xff]
    %v1050 = vld [vmem:[%s1024 + $0xc8] sm:$0xff]
    %v1051 = vld [vmem:[%s1024 + $0xd0] sm:$0xff]
    %v1052 = vld [vmem:[%s1024 + $0xd8] sm:$0xff]
    %v1053 = vld [vmem:[%s1024 + $0xe0] sm:$0xff]
    %v1054 = vld [vmem:[%s1024 + $0xe8] sm:$0xff]
    %v1055 = vld [vmem:[%s1024 + $0xf0] sm:$0xff]
    %v1056 = vld [vmem:[%s1024 + $0xf8] sm:$0xff]
    %v1057 = vld [vmem:[%s1024 + $0x100] sm:$0xff]
    %v1058 = vld [vmem:[%s1024 + $0x108] sm:$0xff]
    %v1059 = vld [vmem:[%s1024 + $0x110] sm:$0xff]
    %v1060 = vld [vmem:[%s1024 + $0x118] sm:$0xff]
    %v1061 = vld [vmem:[%s1024 + $0x120] sm:$0xff]
    %v1062 = vld [vmem:[%s1024 + $0x128] sm:$0xff]
    %v1063 = vld [vmem:[%s1024 + $0x130] sm:$0xff]
    %v1064 = vld [vmem:[%s1024 + $0x138] sm:$0xff]
    %v1065 = vld [vmem:[%s1024 + $0x140] sm:$0xff]
    %v1066 = vld [vmem:[%s1024 + $0x148] sm:$0xff]
    %v1067 = vld [vmem:[%s1024 + $0x150] sm:$0xff]
    %v1068 = vld [vmem:[%s1024 + $0x158] sm:$0xff]
    %v1069 = vld [vmem:[%s1024 + $0x160] sm:$0xff]
    %v1070 = vld [vmem:[%s1024 + $0x168] sm:$0xff]
    %v1071 = vld [vmem:[%s1024 + $0x170] sm:$0xff]
    %v1072 = vld [vmem:[%s1024 + $0x178] sm:$0xff]
    %v1073 = vld [vmem:[%s1024 + $0x180] sm:$0xff]
    %v1074 = vld [vmem:[%s1024 + $0x188] sm:$0xff]
    %v1075 = vld [vmem:[%s1024 + $0x190] sm:$0xff]
    %v1076 = vld [vmem:[%s1024 + $0x198] sm:$0xff]
    %v1077 = vld [vmem:[%s1024 + $0x1a0] sm:$0xff]
    %v1078 = vld [vmem:[%s1024 + $0x1a8] sm:$0xff]
    %v1079 = vld [vmem:[%s1024 + $0x1b0] sm:$0xff]
    %v1080 = vld [vmem:[%s1024 + $0x1b8] sm:$0xff]
    %v1081 = vld [vmem:[%s1024 + $0x1c0] sm:$0xff]
    %v1082 = vld [vmem:[%s1024 + $0x1c8] sm:$0xff]
    %v1083 = vld [vmem:[%s1024 + $0x1d0] sm:$0xff]
    %v1084 = vld [vmem:[%s1024 + $0x1d8] sm:$0xff]
    %v1085 = vld [vmem:[%s1024 + $0x1e0] sm:$0xff]
    %v1086 = vld [vmem:[%s1024 + $0x1e8] sm:$0xff]
    %v1087 = vld [vmem:[%s1024 + $0x1f0] sm:$0xff]
    %v1088 = vld [vmem:[%s1024 + $0x1f8] sm:$0xff]
    %1089 = vmatprep.subr.mxu0 %v1026
    %1090 = vmatpush1.msra.mxu0 %v1025
    %1091 = vmatprep.subr.mxu0 %v1028
    %1092 = vmatpush1.msra.mxu0 %v1027
    %1093 = vmatprep.subr.mxu0 %v1030
    %1094 = vmatpush1.msra.mxu0 %v1029
    %1095 = vmatprep.subr.mxu0 %v1032
    %1096 = vmatpush1.msra.mxu0 %v1031
    %1097 = vmatprep.subr.mxu0 %v1034
    %1098 = vmatpush1.msra.mxu0 %v1033
    %1099 = vmatprep.subr.mxu0 %v1036
    %1100 = vmatpush1.msra.mxu0 %v1035
    %1101 = vmatprep.subr.mxu0 %v1038
    %1102 = vmatpush1.msra.mxu0 %v1037
    %1103 = vmatprep.subr.mxu0 %v1040
    %1104 = vmatpush1.msra.mxu0 %v1039
    %1105 = vmatprep.subr.mxu0 %v1042
    %1106 = vmatpush1.msra.mxu0 %v1041
    %1107 = vmatprep.subr.mxu0 %v1044
    %1108 = vmatpush1.msra.mxu0 %v1043
    %1109 = vmatprep.subr.mxu0 %v1046
    %1110 = vmatpush1.msra.mxu0 %v1045
    %1111 = vmatprep.subr.mxu0 %v1048
    %1112 = vmatpush1.msra.mxu0 %v1047
    %1113 = vmatprep.subr.mxu0 %v1050
    %1114 = vmatpush1.msra.mxu0 %v1049
    %1115 = vmatprep.subr.mxu0 %v1052
    %1116 = vmatpush1.msra.mxu0 %v1051
    %1117 = vmatprep.subr.mxu0 %v1054
    %1118 = vmatpush1.msra.mxu0 %v1053
    %1119 = vmatprep.subr.mxu0 %v1056
    %1120 = vmatpush1.msra.mxu0 %v1055
    %1121 = vmatprep.subr.mxu0 %v1058
    %1122 = vmatpush1.msra.mxu0 %v1057
    %1123 = vmatprep.subr.mxu0 %v1060
    %1124 = vmatpush1.msra.mxu0 %v1059
    %1125 = vmatprep.subr.mxu0 %v1062
    %1126 = vmatpush1.msra.mxu0 %v1061
    %1127 = vmatprep.subr.mxu0 %v1064
    %1128 = vmatpush1.msra.mxu0 %v1063
    %1129 = vmatprep.subr.mxu0 %v1066
    %1130 = vmatpush1.msra.mxu0 %v1065
    %1131 = vmatprep.subr.mxu0 %v1068
    %1132 = vmatpush1.msra.mxu0 %v1067
    %1133 = vmatprep.subr.mxu0 %v1070
    %1134 = vmatpush1.msra.mxu0 %v1069
    %1135 = vmatprep.subr.mxu0 %v1072
    %1136 = vmatpush1.msra.mxu0 %v1071
    %1137 = vmatprep.subr.mxu0 %v1074
    %1138 = vmatpush1.msra.mxu0 %v1073
    %1139 = vmatprep.subr.mxu0 %v1076
    %1140 = vmatpush1.msra.mxu0 %v1075
    %1141 = vmatprep.subr.mxu0 %v1078
    %1142 = vmatpush1.msra.mxu0 %v1077
    %1143 = vmatprep.subr.mxu0 %v1080
    %1144 = vmatpush1.msra.mxu0 %v1079
    %1145 = vmatprep.subr.mxu0 %v1082
    %1146 = vmatpush1.msra.mxu0 %v1081
    %1147 = vmatprep.subr.mxu0 %v1084
    %1148 = vmatpush1.msra.mxu0 %v1083
    %1149 = vmatprep.subr.mxu0 %v1086
    %1150 = vmatpush1.msra.mxu0 %v1085
    %1151 = vmatprep.subr.mxu0 %v1088
    %1152 = vmatpush1.msra.mxu0 %v1087
    %1153 = vmatprep.mubr.f32.mxu0 %v271
    %1154 = vmatmul.mubr.f32.gmra.mrb[0].mxu0 %v269
    %v1155 = vpop.f32.mrb[0].mxu0
    %v1156 = vadd.f32 0.0, %v1155
    %v1157 = vpop.f32.mrb[0].mxu0
    %v1158 = vadd.f32 0.0, %v1157
    %1159 = vdwg.mxu0
    %s1160 = scalar_lea.vmem [#allocation8], 48
    %v1161 = vld [vmem:[%s1160] sm:$0xff]
    %v1162 = vld [vmem:[%s1160 + $0x8] sm:$0xff]
    %v1163 = vmul.f32 %v1161, %v1156
    %v1164 = vmul.f32 %v1162, %v1158
    %v1165 = vadd.f32 %v1022, %v1163
    %v1166 = vadd.f32 %v1023, %v1164
    %v1167 = vadd.f32 %v269, %v595
    %v1168 = vadd.f32 %v271, %v596
    %v1169 = vadd.f32 %v1167, %v1165
    %v1170 = vadd.f32 %v1168, %v1166
    %s1171 = scalar_lea.vmem [#allocation5], 8
    %v1172 = vld [vmem:[%s1171] sm:$0xff]
    %s1173 = scalar_lea.vmem %s4, 8
    %v1174 = vld [vmem:[%s1173] sm:$0xff]
    %1176 = vset.pattern.permute.xlu0 0
    %1177 = vperm.xlu0 %1176, %v1174
    %v1178 = vpop.permute.xlu0 %1177
    %v1181 = vsel %vm280, %v1172, 0
    %1183 = vmatprep.subr.mxu0 %v1170
    %1184 = vmatpush1.msra.mxu0 %v1169
    %1185 = vmatprep.subr.mxu0 0.0
    %1186 = vmatpush1.msra.mxu0 0.0
    %1187 = vmatprep.subr.mxu0 0.0
    %1188 = vmatpush1.msra.mxu0 0.0
    %1189 = vmatprep.subr.mxu0 0.0
    %1190 = vmatpush1.msra.mxu0 0.0
    %1191 = vmatprep.subr.mxu0 0.0
    %1192 = vmatpush1.msra.mxu0 0.0
    %1193 = vmatprep.subr.mxu0 0.0
    %1194 = vmatpush1.msra.mxu0 0.0
    %1195 = vmatprep.subr.mxu0 0.0
    %1196 = vmatpush1.msra.mxu0 0.0
    %1197 = vmatprep.subr.mxu0 0.0
    %1198 = vmatpush1.msra.mxu0 0.0
    %1199 = vmatprep.subr.mxu0 0.0
    %1200 = vmatpush1.msra.mxu0 0.0
    %1201 = vmatprep.subr.mxu0 0.0
    %1202 = vmatpush1.msra.mxu0 0.0
    %1203 = vmatprep.subr.mxu0 0.0
    %1204 = vmatpush1.msra.mxu0 0.0
    %1205 = vmatprep.subr.mxu0 0.0
    %1206 = vmatpush1.msra.mxu0 0.0
    %1207 = vmatprep.subr.mxu0 0.0
    %1208 = vmatpush1.msra.mxu0 0.0
    %1209 = vmatprep.subr.mxu0 0.0
    %1210 = vmatpush1.msra.mxu0 0.0
    %1211 = vmatprep.subr.mxu0 0.0
    %1212 = vmatpush1.msra.mxu0 0.0
    %1213 = vmatprep.subr.mxu0 0.0
    %1214 = vmatpush1.msra.mxu0 0.0
    %1215 = vmatprep.subr.mxu0 0.0
    %1216 = vmatpush1.msra.mxu0 0.0
    %1217 = vmatprep.subr.mxu0 0.0
    %1218 = vmatpush1.msra.mxu0 0.0
    %1219 = vmatprep.subr.mxu0 0.0
    %1220 = vmatpush1.msra.mxu0 0.0
    %1221 = vmatprep.subr.mxu0 0.0
    %1222 = vmatpush1.msra.mxu0 0.0
    %1223 = vmatprep.subr.mxu0 0.0
    %1224 = vmatpush1.msra.mxu0 0.0
    %1225 = vmatprep.subr.mxu0 0.0
    %1226 = vmatpush1.msra.mxu0 0.0
    %1227 = vmatprep.subr.mxu0 0.0
    %1228 = vmatpush1.msra.mxu0 0.0
    %1229 = vmatprep.subr.mxu0 0.0
    %1230 = vmatpush1.msra.mxu0 0.0
    %1231 = vmatprep.subr.mxu0 0.0
    %1232 = vmatpush1.msra.mxu0 0.0
    %1233 = vmatprep.subr.mxu0 0.0
    %1234 = vmatpush1.msra.mxu0 0.0
    %1235 = vmatprep.subr.mxu0 0.0
    %1236 = vmatpush1.msra.mxu0 0.0
    %1237 = vmatprep.subr.mxu0 0.0
    %1238 = vmatpush1.msra.mxu0 0.0
    %1239 = vmatprep.subr.mxu0 0.0
    %1240 = vmatpush1.msra.mxu0 0.0
    %1241 = vmatprep.subr.mxu0 0.0
    %1242 = vmatpush1.msra.mxu0 0.0
    %1243 = vmatprep.subr.mxu0 0.0
    %1244 = vmatpush1.msra.mxu0 0.0
    %1245 = vmatprep.subr.mxu0 0.0
    %1246 = vmatpush1.msra.mxu0 0.0
    %1247 = vmatprep.mubr.f32.mxu0 0.0
    %1248 = vmatmul.mubr.f32.gmra.mrb[0].mxu0 %v1181
    %v1249 = vpop.f32.mrb[0].mxu0
    %v1250 = vadd.f32 %v1178, %v1249
    %v1251 = vpop.f32.mrb[0].mxu0
    %v1252 = vadd.f32 %v1178, %v1251
    %1253 = vdwg.mxu0
    %1254 = vmatprep.subr.mxu0 %v356
    %1255 = vmatpush1.msra.mxu0 %v355
    %1256 = vmatprep.subr.mxu0 %v358
    %1257 = vmatpush1.msra.mxu0 %v357
    %1258 = vmatprep.subr.mxu0 %v360
    %1259 = vmatpush1.msra.mxu0 %v359
    %1260 = vmatprep.subr.mxu0 %v362
    %1261 = vmatpush1.msra.mxu0 %v361
    %1262 = vmatprep.subr.mxu0 %v364
    %1263 = vmatpush1.msra.mxu0 %v363
    %1264 = vmatprep.subr.mxu0 %v366
    %1265 = vmatpush1.msra.mxu0 %v365
    %1266 = vmatprep.subr.mxu0 %v368
    %1267 = vmatpush1.msra.mxu0 %v367
    %1268 = vmatprep.subr.mxu0 %v370
    %1269 = vmatpush1.msra.mxu0 %v369
    %1270 = vmatprep.subr.mxu0 %v372
    %1271 = vmatpush1.msra.mxu0 %v371
    %1272 = vmatprep.subr.mxu0 %v374
    %1273 = vmatpush1.msra.mxu0 %v373
    %1274 = vmatprep.subr.mxu0 %v376
    %1275 = vmatpush1.msra.mxu0 %v375
    %1276 = vmatprep.subr.mxu0 %v378
    %1277 = vmatpush1.msra.mxu0 %v377
    %1278 = vmatprep.subr.mxu0 %v380
    %1279 = vmatpush1.msra.mxu0 %v379
    %1280 = vmatprep.subr.mxu0 %v382
    %1281 = vmatpush1.msra.mxu0 %v381
    %1282 = vmatprep.subr.mxu0 %v384
    %1283 = vmatpush1.msra.mxu0 %v383
    %1284 = vmatprep.subr.mxu0 %v386
    %1285 = vmatpush1.msra.mxu0 %v385
    %1286 = vmatprep.subr.mxu0 %v388
    %1287 = vmatpush1.msra.mxu0 %v387
    %1288 = vmatprep.subr.mxu0 %v390
    %1289 = vmatpush1.msra.mxu0 %v389
    %1290 = vmatprep.subr.mxu0 %v392
    %1291 = vmatpush1.msra.mxu0 %v391
    %1292 = vmatprep.subr.mxu0 %v394
    %1293 = vmatpush1.msra.mxu0 %v393
    %1294 = vmatprep.subr.mxu0 %v396
    %1295 = vmatpush1.msra.mxu0 %v395
    %1296 = vmatprep.subr.mxu0 %v398
    %1297 = vmatpush1.msra.mxu0 %v397
    %1298 = vmatprep.subr.mxu0 %v400
    %1299 = vmatpush1.msra.mxu0 %v399
    %1300 = vmatprep.subr.mxu0 %v402
    %1301 = vmatpush1.msra.mxu0 %v401
    %1302 = vmatprep.subr.mxu0 %v404
    %1303 = vmatpush1.msra.mxu0 %v403
    %1304 = vmatprep.subr.mxu0 %v406
    %1305 = vmatpush1.msra.mxu0 %v405
    %1306 = vmatprep.subr.mxu0 %v408
    %1307 = vmatpush1.msra.mxu0 %v407
    %1308 = vmatprep.subr.mxu0 %v410
    %1309 = vmatpush1.msra.mxu0 %v409
    %1310 = vmatprep.subr.mxu0 %v412
    %1311 = vmatpush1.msra.mxu0 %v411
    %1312 = vmatprep.subr.mxu0 %v414
    %1313 = vmatpush1.msra.mxu0 %v413
    %1314 = vmatprep.subr.mxu0 %v416
    %1315 = vmatpush1.msra.mxu0 %v415
    %1316 = vmatprep.subr.mxu0 %v418
    %1317 = vmatpush1.msra.mxu0 %v417
    %1318 = vmatprep.mubr.f32.mxu0 %v1252
    %1319 = vmatmul.mubr.f32.gmra.mrb[0].mxu0 %v1250
    %v1320 = vpop.f32.mrb[0].mxu0
    %v1321 = vadd.f32 0.0, %v1320
    %v1322 = vpop.f32.mrb[0].mxu0
    %v1323 = vadd.f32 0.0, %v1322
    %1324 = vdwg.mxu0
    %v1325 = vsub.f32 %v1250, %v1321
    %v1326 = vsub.f32 %v1252, %v1323
    %v1327 = vmul.f32 %v1325, %v1325
    %v1328 = vmul.f32 %v1326, %v1326
    %1329 = vmatprep.subr.mxu0 %v356
    %1330 = vmatpush1.msra.mxu0 %v355
    %1331 = vmatprep.subr.mxu0 %v358
    %1332 = vmatpush1.msra.mxu0 %v357
    %1333 = vmatprep.subr.mxu0 %v360
    %1334 = vmatpush1.msra.mxu0 %v359
    %1335 = vmatprep.subr.mxu0 %v362
    %1336 = vmatpush1.msra.mxu0 %v361
    %1337 = vmatprep.subr.mxu0 %v364
    %1338 = vmatpush1.msra.mxu0 %v363
    %1339 = vmatprep.subr.mxu0 %v366
    %1340 = vmatpush1.msra.mxu0 %v365
    %1341 = vmatprep.subr.mxu0 %v368
    %1342 = vmatpush1.msra.mxu0 %v367
    %1343 = vmatprep.subr.mxu0 %v370
    %1344 = vmatpush1.msra.mxu0 %v369
    %1345 = vmatprep.subr.mxu0 %v372
    %1346 = vmatpush1.msra.mxu0 %v371
    %1347 = vmatprep.subr.mxu0 %v374
    %1348 = vmatpush1.msra.mxu0 %v373
    %1349 = vmatprep.subr.mxu0 %v376
    %1350 = vmatpush1.msra.mxu0 %v375
    %1351 = vmatprep.subr.mxu0 %v378
    %1352 = vmatpush1.msra.mxu0 %v377
    %1353 = vmatprep.subr.mxu0 %v380
    %1354 = vmatpush1.msra.mxu0 %v379
    %1355 = vmatprep.subr.mxu0 %v382
    %1356 = vmatpush1.msra.mxu0 %v381
    %1357 = vmatprep.subr.mxu0 %v384
    %1358 = vmatpush1.msra.mxu0 %v383
    %1359 = vmatprep.subr.mxu0 %v386
    %1360 = vmatpush1.msra.mxu0 %v385
    %1361 = vmatprep.subr.mxu0 %v388
    %1362 = vmatpush1.msra.mxu0 %v387
    %1363 = vmatprep.subr.mxu0 %v390
    %1364 = vmatpush1.msra.mxu0 %v389
    %1365 = vmatprep.subr.mxu0 %v392
    %1366 = vmatpush1.msra.mxu0 %v391
    %1367 = vmatprep.subr.mxu0 %v394
    %1368 = vmatpush1.msra.mxu0 %v393
    %1369 = vmatprep.subr.mxu0 %v396
    %1370 = vmatpush1.msra.mxu0 %v395
    %1371 = vmatprep.subr.mxu0 %v398
    %1372 = vmatpush1.msra.mxu0 %v397
    %1373 = vmatprep.subr.mxu0 %v400
    %1374 = vmatpush1.msra.mxu0 %v399
    %1375 = vmatprep.subr.mxu0 %v402
    %1376 = vmatpush1.msra.mxu0 %v401
    %1377 = vmatprep.subr.mxu0 %v404
    %1378 = vmatpush1.msra.mxu0 %v403
    %1379 = vmatprep.subr.mxu0 %v406
    %1380 = vmatpush1.msra.mxu0 %v405
    %1381 = vmatprep.subr.mxu0 %v408
    %1382 = vmatpush1.msra.mxu0 %v407
    %1383 = vmatprep.subr.mxu0 %v410
    %1384 = vmatpush1.msra.mxu0 %v409
    %1385 = vmatprep.subr.mxu0 %v412
    %1386 = vmatpush1.msra.mxu0 %v411
    %1387 = vmatprep.subr.mxu0 %v414
    %1388 = vmatpush1.msra.mxu0 %v413
    %1389 = vmatprep.subr.mxu0 %v416
    %1390 = vmatpush1.msra.mxu0 %v415
    %1391 = vmatprep.subr.mxu0 %v418
    %1392 = vmatpush1.msra.mxu0 %v417
    %1393 = vmatprep.mubr.f32.mxu0 %v1328
    %1394 = vmatmul.mubr.f32.gmra.mrb[0].mxu0 %v1327
    %v1395 = vpop.f32.mrb[0].mxu0
    %v1396 = vadd.f32 1e-05, %v1395
    %v1397 = vpop.f32.mrb[0].mxu0
    %v1398 = vadd.f32 1e-05, %v1397
    %1399 = vdwg.mxu0
    %v1400 = vrsqrt.pop %v1396
    %v1401 = vrsqrt.pop %v1398
    %v1402 = vmul.f32 %v1325, %v1400
    %v1403 = vmul.f32 %v1326, %v1401
    %s1404 = scalar_lea.vmem %s6, 2
    %v1405 = vld [vmem:[%s1404] sm:$0x3]
    %v1407 = vlaneseq
    %v1408 = vshrl.u32 %v1407, 7
    %v1409 = vsub.s32 0, %v1408
    %v1410 = vrot.slane %v1405, %v1409
    %v1411 = vlaneseq
    %v1412 = vshrl.u32 %v1411, 7
    %v1413 = vsub.s32 1, %v1412
    %v1414 = vrot.slane %v1405, %v1413
    %v1417 = vmul.f32 %v1402, %v1410
    %v1418 = vmul.f32 %v1403, %v1414
    %s1419 = scalar_lea.vmem %s7, 2
    %v1420 = vld [vmem:[%s1419] sm:$0x3]
    %v1422 = vlaneseq
    %v1423 = vshrl.u32 %v1422, 7
    %v1424 = vsub.s32 0, %v1423
    %v1425 = vrot.slane %v1420, %v1424
    %v1426 = vlaneseq
    %v1427 = vshrl.u32 %v1426, 7
    %v1428 = vsub.s32 1, %v1427
    %v1429 = vrot.slane %v1420, %v1428
    %v1432 = vadd.f32 %v1417, %v1425
    %v1433 = vadd.f32 %v1418, %v1429
    %1434 = vmatprep.subr.mxu0 %v598
    %1435 = vmatpush1.msra.mxu0 %v597
    %1436 = vmatprep.subr.mxu0 %v600
    %1437 = vmatpush1.msra.mxu0 %v599
    %1438 = vmatprep.subr.mxu0 %v602
    %1439 = vmatpush1.msra.mxu0 %v601
    %1440 = vmatprep.subr.mxu0 %v604
    %1441 = vmatpush1.msra.mxu0 %v603
    %1442 = vmatprep.subr.mxu0 %v606
    %1443 = vmatpush1.msra.mxu0 %v605
    %1444 = vmatprep.subr.mxu0 %v608
    %1445 = vmatpush1.msra.mxu0 %v607
    %1446 = vmatprep.subr.mxu0 %v610
    %1447 = vmatpush1.msra.mxu0 %v609
    %1448 = vmatprep.subr.mxu0 %v612
    %1449 = vmatpush1.msra.mxu0 %v611
    %1450 = vmatprep.subr.mxu0 %v614
    %1451 = vmatpush1.msra.mxu0 %v613
    %1452 = vmatprep.subr.mxu0 %v616
    %1453 = vmatpush1.msra.mxu0 %v615
    %1454 = vmatprep.subr.mxu0 %v618
    %1455 = vmatpush1.msra.mxu0 %v617
    %1456 = vmatprep.subr.mxu0 %v620
    %1457 = vmatpush1.msra.mxu0 %v619
    %1458 = vmatprep.subr.mxu0 %v622
    %1459 = vmatpush1.msra.mxu0 %v621
    %1460 = vmatprep.subr.mxu0 %v624
    %1461 = vmatpush1.msra.mxu0 %v623
    %1462 = vmatprep.subr.mxu0 %v626
    %1463 = vmatpush1.msra.mxu0 %v625
    %1464 = vmatprep.subr.mxu0 %v628
    %1465 = vmatpush1.msra.mxu0 %v627
    %1466 = vmatprep.subr.mxu0 %v630
    %1467 = vmatpush1.msra.mxu0 %v629
    %1468 = vmatprep.subr.mxu0 %v632
    %1469 = vmatpush1.msra.mxu0 %v631
    %1470 = vmatprep.subr.mxu0 %v634
    %1471 = vmatpush1.msra.mxu0 %v633
    %1472 = vmatprep.subr.mxu0 %v636
    %1473 = vmatpush1.msra.mxu0 %v635
    %1474 = vmatprep.subr.mxu0 %v638
    %1475 = vmatpush1.msra.mxu0 %v637
    %1476 = vmatprep.subr.mxu0 %v640
    %1477 = vmatpush1.msra.mxu0 %v639
    %1478 = vmatprep.subr.mxu0 %v642
    %1479 = vmatpush1.msra.mxu0 %v641
    %1480 = vmatprep.subr.mxu0 %v644
    %1481 = vmatpush1.msra.mxu0 %v643
    %1482 = vmatprep.subr.mxu0 %v646
    %1483 = vmatpush1.msra.mxu0 %v645
    %1484 = vmatprep.subr.mxu0 %v648
    %1485 = vmatpush1.msra.mxu0 %v647
    %1486 = vmatprep.subr.mxu0 %v650
    %1487 = vmatpush1.msra.mxu0 %v649
    %1488 = vmatprep.subr.mxu0 %v652
    %1489 = vmatpush1.msra.mxu0 %v651
    %1490 = vmatprep.subr.mxu0 %v654
    %1491 = vmatpush1.msra.mxu0 %v653
    %1492 = vmatprep.subr.mxu0 %v656
    %1493 = vmatpush1.msra.mxu0 %v655
    %1494 = vmatprep.subr.mxu0 %v658
    %1495 = vmatpush1.msra.mxu0 %v657
    %1496 = vmatprep.subr.mxu0 %v660
    %1497 = vmatpush1.msra.mxu0 %v659
    %1498 = vmatprep.mubr.f32.mxu0 %v1170
    %1499 = vmatmul.mubr.f32.gmra.mrb[0].mxu0 %v1169
    %v1500 = vpop.f32.mrb[0].mxu0
    %v1501 = vadd.f32 0.0, %v1500
    %v1502 = vpop.f32.mrb[0].mxu0
    %v1503 = vadd.f32 0.0, %v1502
    %1504 = vdwg.mxu0
    %v1505 = vmul.f32 %v732, %v1501
    %v1506 = vmul.f32 %v733, %v1503
    %v1507 = vadd.f32 %v1505, 0.0
    %v1508 = vadd.f32 %v1506, 0.0
    %1509 = vmatprep.subr.mxu0 %v740
    %1510 = vmatpush1.msra.mxu0 %v739
    %1511 = vmatprep.subr.mxu0 %v742
    %1512 = vmatpush1.msra.mxu0 %v741
    %1513 = vmatprep.subr.mxu0 %v744
    %1514 = vmatpush1.msra.mxu0 %v743
    %1515 = vmatprep.subr.mxu0 %v746
    %1516 = vmatpush1.msra.mxu0 %v745
    %1517 = vmatprep.subr.mxu0 %v748
    %1518 = vmatpush1.msra.mxu0 %v747
    %1519 = vmatprep.subr.mxu0 %v750
    %1520 = vmatpush1.msra.mxu0 %v749
    %1521 = vmatprep.subr.mxu0 %v752
    %1522 = vmatpush1.msra.mxu0 %v751
    %1523 = vmatprep.subr.mxu0 %v754
    %1524 = vmatpush1.msra.mxu0 %v753
    %1525 = vmatprep.subr.mxu0 %v756
    %1526 = vmatpush1.msra.mxu0 %v755
    %1527 = vmatprep.subr.mxu0 %v758
    %1528 = vmatpush1.msra.mxu0 %v757
    %1529 = vmatprep.subr.mxu0 %v760
    %1530 = vmatpush1.msra.mxu0 %v759
    %1531 = vmatprep.subr.mxu0 %v762
    %1532 = vmatpush1.msra.mxu0 %v761
    %1533 = vmatprep.subr.mxu0 %v764
    %1534 = vmatpush1.msra.mxu0 %v763
    %1535 = vmatprep.subr.mxu0 %v766
    %1536 = vmatpush1.msra.mxu0 %v765
    %1537 = vmatprep.subr.mxu0 %v768
    %1538 = vmatpush1.msra.mxu0 %v767
    %1539 = vmatprep.subr.mxu0 %v770
    %1540 = vmatpush1.msra.mxu0 %v769
    %1541 = vmatprep.subr.mxu0 %v772
    %1542 = vmatpush1.msra.mxu0 %v771
    %1543 = vmatprep.subr.mxu0 %v774
    %1544 = vmatpush1.msra.mxu0 %v773
    %1545 = vmatprep.subr.mxu0 %v776
    %1546 = vmatpush1.msra.mxu0 %v775
    %1547 = vmatprep.subr.mxu0 %v778
    %1548 = vmatpush1.msra.mxu0 %v777
    %1549 = vmatprep.subr.mxu0 %v780
    %1550 = vmatpush1.msra.mxu0 %v779
    %1551 = vmatprep.subr.mxu0 %v782
    %1552 = vmatpush1.msra.mxu0 %v781
    %1553 = vmatprep.subr.mxu0 %v784
    %1554 = vmatpush1.msra.mxu0 %v783
    %1555 = vmatprep.subr.mxu0 %v786
    %1556 = vmatpush1.msra.mxu0 %v785
    %1557 = vmatprep.subr.mxu0 %v788
    %1558 = vmatpush1.msra.mxu0 %v787
    %1559 = vmatprep.subr.mxu0 %v790
    %1560 = vmatpush1.msra.mxu0 %v789
    %1561 = vmatprep.subr.mxu0 %v792
    %1562 = vmatpush1.msra.mxu0 %v791
    %1563 = vmatprep.subr.mxu0 %v794
    %1564 = vmatpush1.msra.mxu0 %v793
    %1565 = vmatprep.subr.mxu0 %v796
    %1566 = vmatpush1.msra.mxu0 %v795
    %1567 = vmatprep.subr.mxu0 %v798
    %1568 = vmatpush1.msra.mxu0 %v797
    %1569 = vmatprep.subr.mxu0 %v800
    %1570 = vmatpush1.msra.mxu0 %v799
    %1571 = vmatprep.subr.mxu0 %v802
    %1572 = vmatpush1.msra.mxu0 %v801
    %1573 = vmatprep.mubr.f32.mxu0 %v1170
    %1574 = vmatmul.mubr.f32.gmra.mrb[0].mxu0 %v1169
    %v1575 = vpop.f32.mrb[0].mxu0
    %v1576 = vadd.f32 0.0, %v1575
    %v1577 = vpop.f32.mrb[0].mxu0
    %v1578 = vadd.f32 0.0, %v1577
    %1579 = vdwg.mxu0
    %v1580 = vmul.f32 %v875, %v1576
    %v1581 = vmul.f32 %v876, %v1578
    %v1582 = vadd.f32 %v1507, %v1580
    %v1583 = vadd.f32 %v1508, %v1581
    %1584 = vmatprep.subr.mxu0 %v883
    %1585 = vmatpush1.msra.mxu0 %v882
    %1586 = vmatprep.subr.mxu0 %v885
    %1587 = vmatpush1.msra.mxu0 %v884
    %1588 = vmatprep.subr.mxu0 %v887
    %1589 = vmatpush1.msra.mxu0 %v886
    %1590 = vmatprep.subr.mxu0 %v889
    %1591 = vmatpush1.msra.mxu0 %v888
    %1592 = vmatprep.subr.mxu0 %v891
    %1593 = vmatpush1.msra.mxu0 %v890
    %1594 = vmatprep.subr.mxu0 %v893
    %1595 = vmatpush1.msra.mxu0 %v892
    %1596 = vmatprep.subr.mxu0 %v895
    %1597 = vmatpush1.msra.mxu0 %v894
    %1598 = vmatprep.subr.mxu0 %v897
    %1599 = vmatpush1.msra.mxu0 %v896
    %1600 = vmatprep.subr.mxu0 %v899
    %1601 = vmatpush1.msra.mxu0 %v898
    %1602 = vmatprep.subr.mxu0 %v901
    %1603 = vmatpush1.msra.mxu0 %v900
    %1604 = vmatprep.subr.mxu0 %v903
    %1605 = vmatpush1.msra.mxu0 %v902
    %1606 = vmatprep.subr.mxu0 %v905
    %1607 = vmatpush1.msra.mxu0 %v904
    %1608 = vmatprep.subr.mxu0 %v907
    %1609 = vmatpush1.msra.mxu0 %v906
    %1610 = vmatprep.subr.mxu0 %v909
    %1611 = vmatpush1.msra.mxu0 %v908
    %1612 = vmatprep.subr.mxu0 %v911
    %1613 = vmatpush1.msra.mxu0 %v910
    %1614 = vmatprep.subr.mxu0 %v913
    %1615 = vmatpush1.msra.mxu0 %v912
    %1616 = vmatprep.subr.mxu0 %v915
    %1617 = vmatpush1.msra.mxu0 %v914
    %1618 = vmatprep.subr.mxu0 %v917
    %1619 = vmatpush1.msra.mxu0 %v916
    %1620 = vmatprep.subr.mxu0 %v919
    %1621 = vmatpush1.msra.mxu0 %v918
    %1622 = vmatprep.subr.mxu0 %v921
    %1623 = vmatpush1.msra.mxu0 %v920
    %1624 = vmatprep.subr.mxu0 %v923
    %1625 = vmatpush1.msra.mxu0 %v922
    %1626 = vmatprep.subr.mxu0 %v925
    %1627 = vmatpush1.msra.mxu0 %v924
    %1628 = vmatprep.subr.mxu0 %v927
    %1629 = vmatpush1.msra.mxu0 %v926
    %1630 = vmatprep.subr.mxu0 %v929
    %1631 = vmatpush1.msra.mxu0 %v928
    %1632 = vmatprep.subr.mxu0 %v931
    %1633 = vmatpush1.msra.mxu0 %v930
    %1634 = vmatprep.subr.mxu0 %v933
    %1635 = vmatpush1.msra.mxu0 %v932
    %1636 = vmatprep.subr.mxu0 %v935
    %1637 = vmatpush1.msra.mxu0 %v934
    %1638 = vmatprep.subr.mxu0 %v937
    %1639 = vmatpush1.msra.mxu0 %v936
    %1640 = vmatprep.subr.mxu0 %v939
    %1641 = vmatpush1.msra.mxu0 %v938
    %1642 = vmatprep.subr.mxu0 %v941
    %1643 = vmatpush1.msra.mxu0 %v940
    %1644 = vmatprep.subr.mxu0 %v943
    %1645 = vmatpush1.msra.mxu0 %v942
    %1646 = vmatprep.subr.mxu0 %v945
    %1647 = vmatpush1.msra.mxu0 %v944
    %1648 = vmatprep.mubr.f32.mxu0 %v1170
    %1649 = vmatmul.mubr.f32.gmra.mrb[0].mxu0 %v1169
    %v1650 = vpop.f32.mrb[0].mxu0
    %v1651 = vadd.f32 0.0, %v1650
    %v1652 = vpop.f32.mrb[0].mxu0
    %v1653 = vadd.f32 0.0, %v1652
    %1654 = vdwg.mxu0
    %v1655 = vmul.f32 %v1018, %v1651
    %v1656 = vmul.f32 %v1019, %v1653
    %v1657 = vadd.f32 %v1582, %v1655
    %v1658 = vadd.f32 %v1583, %v1656
    %1659 = vmatprep.subr.mxu0 %v1026
    %1660 = vmatpush1.msra.mxu0 %v1025
    %1661 = vmatprep.subr.mxu0 %v1028
    %1662 = vmatpush1.msra.mxu0 %v1027
    %1663 = vmatprep.subr.mxu0 %v1030
    %1664 = vmatpush1.msra.mxu0 %v1029
    %1665 = vmatprep.subr.mxu0 %v1032
    %1666 = vmatpush1.msra.mxu0 %v1031
    %1667 = vmatprep.subr.mxu0 %v1034
    %1668 = vmatpush1.msra.mxu0 %v1033
    %1669 = vmatprep.subr.mxu0 %v1036
    %1670 = vmatpush1.msra.mxu0 %v1035
    %1671 = vmatprep.subr.mxu0 %v1038
    %1672 = vmatpush1.msra.mxu0 %v1037
    %1673 = vmatprep.subr.mxu0 %v1040
    %1674 = vmatpush1.msra.mxu0 %v1039
    %1675 = vmatprep.subr.mxu0 %v1042
    %1676 = vmatpush1.msra.mxu0 %v1041
    %1677 = vmatprep.subr.mxu0 %v1044
    %1678 = vmatpush1.msra.mxu0 %v1043
    %1679 = vmatprep.subr.mxu0 %v1046
    %1680 = vmatpush1.msra.mxu0 %v1045
    %1681 = vmatprep.subr.mxu0 %v1048
    %1682 = vmatpush1.msra.mxu0 %v1047
    %1683 = vmatprep.subr.mxu0 %v1050
    %1684 = vmatpush1.msra.mxu0 %v1049
    %1685 = vmatprep.subr.mxu0 %v1052
    %1686 = vmatpush1.msra.mxu0 %v1051
    %1687 = vmatprep.subr.mxu0 %v1054
    %1688 = vmatpush1.msra.mxu0 %v1053
    %1689 = vmatprep.subr.mxu0 %v1056
    %1690 = vmatpush1.msra.mxu0 %v1055
    %1691 = vmatprep.subr.mxu0 %v1058
    %1692 = vmatpush1.msra.mxu0 %v1057
    %1693 = vmatprep.subr.mxu0 %v1060
    %1694 = vmatpush1.msra.mxu0 %v1059
    %1695 = vmatprep.subr.mxu0 %v1062
    %1696 = vmatpush1.msra.mxu0 %v1061
    %1697 = vmatprep.subr.mxu0 %v1064
    %1698 = vmatpush1.msra.mxu0 %v1063
    %1699 = vmatprep.subr.mxu0 %v1066
    %1700 = vmatpush1.msra.mxu0 %v1065
    %1701 = vmatprep.subr.mxu0 %v1068
    %1702 = vmatpush1.msra.mxu0 %v1067
    %1703 = vmatprep.subr.mxu0 %v1070
    %1704 = vmatpush1.msra.mxu0 %v1069
    %1705 = vmatprep.subr.mxu0 %v1072
    %1706 = vmatpush1.msra.mxu0 %v1071
    %1707 = vmatprep.subr.mxu0 %v1074
    %1708 = vmatpush1.msra.mxu0 %v1073
    %1709 = vmatprep.subr.mxu0 %v1076
    %1710 = vmatpush1.msra.mxu0 %v1075
    %1711 = vmatprep.subr.mxu0 %v1078
    %1712 = vmatpush1.msra.mxu0 %v1077
    %1713 = vmatprep.subr.mxu0 %v1080
    %1714 = vmatpush1.msra.mxu0 %v1079
    %1715 = vmatprep.subr.mxu0 %v1082
    %1716 = vmatpush1.msra.mxu0 %v1081
    %1717 = vmatprep.subr.mxu0 %v1084
    %1718 = vmatpush1.msra.mxu0 %v1083
    %1719 = vmatprep.subr.mxu0 %v1086
    %1720 = vmatpush1.msra.mxu0 %v1085
    %1721 = vmatprep.subr.mxu0 %v1088
    %1722 = vmatpush1.msra.mxu0 %v1087
    %1723 = vmatprep.mubr.f32.mxu0 %v1170
    %1724 = vmatmul.mubr.f32.gmra.mrb[0].mxu0 %v1169
    %v1725 = vpop.f32.mrb[0].mxu0
    %v1726 = vadd.f32 0.0, %v1725
    %v1727 = vpop.f32.mrb[0].mxu0
    %v1728 = vadd.f32 0.0, %v1727
    %1729 = vdwg.mxu0
    %v1730 = vmul.f32 %v1161, %v1726
    %v1731 = vmul.f32 %v1162, %v1728
    %v1732 = vadd.f32 %v1657, %v1730
    %v1733 = vadd.f32 %v1658, %v1731
    %v1734 = vadd.f32 %v1169, %v1432
    %v1735 = vadd.f32 %v1170, %v1433
    %v1736 = vadd.f32 %v1734, %v1732
    %v1737 = vadd.f32 %v1735, %v1733
    %v1738 = vld [vmem:[#allocation11] sm:$0xff]
    %v1739 = vld [vmem:[#allocation11 + $0x8] sm:$0xff]
    %v1740 = vld [vmem:[#allocation11 + $0x10] sm:$0xff]
    %v1741 = vld [vmem:[#allocation11 + $0x18] sm:$0xff]
    %v1742 = vld [vmem:[#allocation11 + $0x20] sm:$0xff]
    %v1743 = vld [vmem:[#allocation11 + $0x28] sm:$0xff]
    %v1744 = vld [vmem:[#allocation11 + $0x30] sm:$0xff]
    %v1745 = vld [vmem:[#allocation11 + $0x38] sm:$0xff]
    %v1746 = vld [vmem:[#allocation11 + $0x40] sm:$0xff]
    %v1747 = vld [vmem:[#allocation11 + $0x48] sm:$0xff]
    %v1748 = vld [vmem:[#allocation11 + $0x50] sm:$0xff]
    %v1749 = vld [vmem:[#allocation11 + $0x58] sm:$0xff]
    %v1750 = vld [vmem:[#allocation11 + $0x60] sm:$0xff]
    %v1751 = vld [vmem:[#allocation11 + $0x68] sm:$0xff]
    %v1752 = vld [vmem:[#allocation11 + $0x70] sm:$0xff]
    %v1753 = vld [vmem:[#allocation11 + $0x78] sm:$0xff]
    %v1754 = vld [vmem:[#allocation11 + $0x80] sm:$0xff]
    %v1755 = vld [vmem:[#allocation11 + $0x88] sm:$0xff]
    %v1756 = vld [vmem:[#allocation11 + $0x90] sm:$0xff]
    %v1757 = vld [vmem:[#allocation11 + $0x98] sm:$0xff]
    %v1758 = vld [vmem:[#allocation11 + $0xa0] sm:$0xff]
    %v1759 = vld [vmem:[#allocation11 + $0xa8] sm:$0xff]
    %v1760 = vld [vmem:[#allocation11 + $0xb0] sm:$0xff]
    %v1761 = vld [vmem:[#allocation11 + $0xb8] sm:$0xff]
    %v1762 = vld [vmem:[#allocation11 + $0xc0] sm:$0xff]
    %v1763 = vld [vmem:[#allocation11 + $0xc8] sm:$0xff]
    %v1764 = vld [vmem:[#allocation11 + $0xd0] sm:$0xff]
    %v1765 = vld [vmem:[#allocation11 + $0xd8] sm:$0xff]
    %v1766 = vld [vmem:[#allocation11 + $0xe0] sm:$0xff]
    %v1767 = vld [vmem:[#allocation11 + $0xe8] sm:$0xff]
    %v1768 = vld [vmem:[#allocation11 + $0xf0] sm:$0xff]
    %v1769 = vld [vmem:[#allocation11 + $0xf8] sm:$0xff]
    %v1770 = vld [vmem:[#allocation11 + $0x100] sm:$0xff]
    %v1771 = vld [vmem:[#allocation11 + $0x108] sm:$0xff]
    %v1772 = vld [vmem:[#allocation11 + $0x110] sm:$0xff]
    %v1773 = vld [vmem:[#allocation11 + $0x118] sm:$0xff]
    %v1774 = vld [vmem:[#allocation11 + $0x120] sm:$0xff]
    %v1775 = vld [vmem:[#allocation11 + $0x128] sm:$0xff]
    %v1776 = vld [vmem:[#allocation11 + $0x130] sm:$0xff]
    %v1777 = vld [vmem:[#allocation11 + $0x138] sm:$0xff]
    %v1778 = vld [vmem:[#allocation11 + $0x140] sm:$0xff]
    %v1779 = vld [vmem:[#allocation11 + $0x148] sm:$0xff]
    %v1780 = vld [vmem:[#allocation11 + $0x150] sm:$0xff]
    %v1781 = vld [vmem:[#allocation11 + $0x158] sm:$0xff]
    %v1782 = vld [vmem:[#allocation11 + $0x160] sm:$0xff]
    %v1783 = vld [vmem:[#allocation11 + $0x168] sm:$0xff]
    %v1784 = vld [vmem:[#allocation11 + $0x170] sm:$0xff]
    %v1785 = vld [vmem:[#allocation11 + $0x178] sm:$0xff]
    %v1786 = vld [vmem:[#allocation11 + $0x180] sm:$0xff]
    %v1787 = vld [vmem:[#allocation11 + $0x188] sm:$0xff]
    %v1788 = vld [vmem:[#allocation11 + $0x190] sm:$0xff]
    %v1789 = vld [vmem:[#allocation11 + $0x198] sm:$0xff]
    %v1790 = vld [vmem:[#allocation11 + $0x1a0] sm:$0xff]
    %v1791 = vld [vmem:[#allocation11 + $0x1a8] sm:$0xff]
    %v1792 = vld [vmem:[#allocation11 + $0x1b0] sm:$0xff]
    %v1793 = vld [vmem:[#allocation11 + $0x1b8] sm:$0xff]
    %v1794 = vld [vmem:[#allocation11 + $0x1c0] sm:$0xff]
    %v1795 = vld [vmem:[#allocation11 + $0x1c8] sm:$0xff]
    %v1796 = vld [vmem:[#allocation11 + $0x1d0] sm:$0xff]
    %v1797 = vld [vmem:[#allocation11 + $0x1d8] sm:$0xff]
    %v1798 = vld [vmem:[#allocation11 + $0x1e0] sm:$0xff]
    %v1799 = vld [vmem:[#allocation11 + $0x1e8] sm:$0xff]
    %v1800 = vld [vmem:[#allocation11 + $0x1f0] sm:$0xff]
    %v1801 = vld [vmem:[#allocation11 + $0x1f8] sm:$0xff]
    %v1802 = vld [vmem:[#allocation11 + $0x200] sm:$0xff]
    %v1803 = vld [vmem:[#allocation11 + $0x208] sm:$0xff]
    %v1804 = vld [vmem:[#allocation11 + $0x210] sm:$0xff]
    %v1805 = vld [vmem:[#allocation11 + $0x218] sm:$0xff]
    %v1806 = vld [vmem:[#allocation11 + $0x220] sm:$0xff]
    %v1807 = vld [vmem:[#allocation11 + $0x228] sm:$0xff]
    %v1808 = vld [vmem:[#allocation11 + $0x230] sm:$0xff]
    %v1809 = vld [vmem:[#allocation11 + $0x238] sm:$0xff]
    %v1810 = vld [vmem:[#allocation11 + $0x240] sm:$0xff]
    %v1811 = vld [vmem:[#allocation11 + $0x248] sm:$0xff]
    %v1812 = vld [vmem:[#allocation11 + $0x250] sm:$0xff]
    %v1813 = vld [vmem:[#allocation11 + $0x258] sm:$0xff]
    %v1814 = vld [vmem:[#allocation11 + $0x260] sm:$0xff]
    %v1815 = vld [vmem:[#allocation11 + $0x268] sm:$0xff]
    %v1816 = vld [vmem:[#allocation11 + $0x270] sm:$0xff]
    %v1817 = vld [vmem:[#allocation11 + $0x278] sm:$0xff]
    %v1818 = vld [vmem:[#allocation11 + $0x280] sm:$0xff]
    %v1819 = vld [vmem:[#allocation11 + $0x288] sm:$0xff]
    %v1820 = vld [vmem:[#allocation11 + $0x290] sm:$0xff]
    %v1821 = vld [vmem:[#allocation11 + $0x298] sm:$0xff]
    %v1822 = vld [vmem:[#allocation11 + $0x2a0] sm:$0xff]
    %v1823 = vld [vmem:[#allocation11 + $0x2a8] sm:$0xff]
    %v1824 = vld [vmem:[#allocation11 + $0x2b0] sm:$0xff]
    %v1825 = vld [vmem:[#allocation11 + $0x2b8] sm:$0xff]
    %v1826 = vld [vmem:[#allocation11 + $0x2c0] sm:$0xff]
    %v1827 = vld [vmem:[#allocation11 + $0x2c8] sm:$0xff]
    %v1828 = vld [vmem:[#allocation11 + $0x2d0] sm:$0xff]
    %v1829 = vld [vmem:[#allocation11 + $0x2d8] sm:$0xff]
    %v1830 = vld [vmem:[#allocation11 + $0x2e0] sm:$0xff]
    %v1831 = vld [vmem:[#allocation11 + $0x2e8] sm:$0xff]
    %v1832 = vld [vmem:[#allocation11 + $0x2f0] sm:$0xff]
    %v1833 = vld [vmem:[#allocation11 + $0x2f8] sm:$0xff]
    %v1834 = vld [vmem:[#allocation11 + $0x300] sm:$0xff]
    %v1835 = vld [vmem:[#allocation11 + $0x308] sm:$0xff]
    %v1836 = vld [vmem:[#allocation11 + $0x310] sm:$0xff]
    %v1837 = vld [vmem:[#allocation11 + $0x318] sm:$0xff]
    %v1838 = vld [vmem:[#allocation11 + $0x320] sm:$0xff]
    %v1839 = vld [vmem:[#allocation11 + $0x328] sm:$0xff]
    %v1840 = vld [vmem:[#allocation11 + $0x330] sm:$0xff]
    %v1841 = vld [vmem:[#allocation11 + $0x338] sm:$0xff]
    %v1842 = vld [vmem:[#allocation11 + $0x340] sm:$0xff]
    %v1843 = vld [vmem:[#allocation11 + $0x348] sm:$0xff]
    %v1844 = vld [vmem:[#allocation11 + $0x350] sm:$0xff]
    %v1845 = vld [vmem:[#allocation11 + $0x358] sm:$0xff]
    %v1846 = vld [vmem:[#allocation11 + $0x360] sm:$0xff]
    %v1847 = vld [vmem:[#allocation11 + $0x368] sm:$0xff]
    %v1848 = vld [vmem:[#allocation11 + $0x370] sm:$0xff]
    %v1849 = vld [vmem:[#allocation11 + $0x378] sm:$0xff]
    %v1850 = vld [vmem:[#allocation11 + $0x380] sm:$0xff]
    %v1851 = vld [vmem:[#allocation11 + $0x388] sm:$0xff]
    %v1852 = vld [vmem:[#allocation11 + $0x390] sm:$0xff]
    %v1853 = vld [vmem:[#allocation11 + $0x398] sm:$0xff]
    %v1854 = vld [vmem:[#allocation11 + $0x3a0] sm:$0xff]
    %v1855 = vld [vmem:[#allocation11 + $0x3a8] sm:$0xff]
    %v1856 = vld [vmem:[#allocation11 + $0x3b0] sm:$0xff]
    %v1857 = vld [vmem:[#allocation11 + $0x3b8] sm:$0xff]
    %v1858 = vld [vmem:[#allocation11 + $0x3c0] sm:$0xff]
    %v1859 = vld [vmem:[#allocation11 + $0x3c8] sm:$0xff]
    %v1860 = vld [vmem:[#allocation11 + $0x3d0] sm:$0xff]
    %v1861 = vld [vmem:[#allocation11 + $0x3d8] sm:$0xff]
    %v1862 = vld [vmem:[#allocation11 + $0x3e0] sm:$0xff]
    %v1863 = vld [vmem:[#allocation11 + $0x3e8] sm:$0xff]
    %v1864 = vld [vmem:[#allocation11 + $0x3f0] sm:$0xff]
    %v1865 = vld [vmem:[#allocation11 + $0x3f8] sm:$0xff]
    %v1866 = vld [vmem:[#allocation11 + $0x400] sm:$0xff]
    %v1867 = vld [vmem:[#allocation11 + $0x408] sm:$0xff]
    %v1868 = vld [vmem:[#allocation11 + $0x410] sm:$0xff]
    %v1869 = vld [vmem:[#allocation11 + $0x418] sm:$0xff]
    %v1870 = vld [vmem:[#allocation11 + $0x420] sm:$0xff]
    %v1871 = vld [vmem:[#allocation11 + $0x428] sm:$0xff]
    %v1872 = vld [vmem:[#allocation11 + $0x430] sm:$0xff]
    %v1873 = vld [vmem:[#allocation11 + $0x438] sm:$0xff]
    %v1874 = vld [vmem:[#allocation11 + $0x440] sm:$0xff]
    %v1875 = vld [vmem:[#allocation11 + $0x448] sm:$0xff]
    %v1876 = vld [vmem:[#allocation11 + $0x450] sm:$0xff]
    %v1877 = vld [vmem:[#allocation11 + $0x458] sm:$0xff]
    %v1878 = vld [vmem:[#allocation11 + $0x460] sm:$0xff]
    %v1879 = vld [vmem:[#allocation11 + $0x468] sm:$0xff]
    %v1880 = vld [vmem:[#allocation11 + $0x470] sm:$0xff]
    %v1881 = vld [vmem:[#allocation11 + $0x478] sm:$0xff]
    %v1882 = vld [vmem:[#allocation11 + $0x480] sm:$0xff]
    %v1883 = vld [vmem:[#allocation11 + $0x488] sm:$0xff]
    %v1884 = vld [vmem:[#allocation11 + $0x490] sm:$0xff]
    %v1885 = vld [vmem:[#allocation11 + $0x498] sm:$0xff]
    %v1886 = vld [vmem:[#allocation11 + $0x4a0] sm:$0xff]
    %v1887 = vld [vmem:[#allocation11 + $0x4a8] sm:$0xff]
    %v1888 = vld [vmem:[#allocation11 + $0x4b0] sm:$0xff]
    %v1889 = vld [vmem:[#allocation11 + $0x4b8] sm:$0xff]
    %v1890 = vld [vmem:[#allocation11 + $0x4c0] sm:$0xff]
    %v1891 = vld [vmem:[#allocation11 + $0x4c8] sm:$0xff]
    %v1892 = vld [vmem:[#allocation11 + $0x4d0] sm:$0xff]
    %v1893 = vld [vmem:[#allocation11 + $0x4d8] sm:$0xff]
    %v1894 = vld [vmem:[#allocation11 + $0x4e0] sm:$0xff]
    %v1895 = vld [vmem:[#allocation11 + $0x4e8] sm:$0xff]
    %v1896 = vld [vmem:[#allocation11 + $0x4f0] sm:$0xff]
    %v1897 = vld [vmem:[#allocation11 + $0x4f8] sm:$0xff]
    %v1898 = vld [vmem:[#allocation11 + $0x500] sm:$0xff]
    %v1899 = vld [vmem:[#allocation11 + $0x508] sm:$0xff]
    %v1900 = vld [vmem:[#allocation11 + $0x510] sm:$0xff]
    %v1901 = vld [vmem:[#allocation11 + $0x518] sm:$0xff]
    %v1902 = vld [vmem:[#allocation11 + $0x520] sm:$0xff]
    %v1903 = vld [vmem:[#allocation11 + $0x528] sm:$0xff]
    %v1904 = vld [vmem:[#allocation11 + $0x530] sm:$0xff]
    %v1905 = vld [vmem:[#allocation11 + $0x538] sm:$0xff]
    %v1906 = vld [vmem:[#allocation11 + $0x540] sm:$0xff]
    %v1907 = vld [vmem:[#allocation11 + $0x548] sm:$0xff]
    %v1908 = vld [vmem:[#allocation11 + $0x550] sm:$0xff]
    %v1909 = vld [vmem:[#allocation11 + $0x558] sm:$0xff]
    %v1910 = vld [vmem:[#allocation11 + $0x560] sm:$0xff]
    %v1911 = vld [vmem:[#allocation11 + $0x568] sm:$0xff]
    %v1912 = vld [vmem:[#allocation11 + $0x570] sm:$0xff]
    %v1913 = vld [vmem:[#allocation11 + $0x578] sm:$0xff]
    %v1914 = vld [vmem:[#allocation11 + $0x580] sm:$0xff]
    %v1915 = vld [vmem:[#allocation11 + $0x588] sm:$0xff]
    %v1916 = vld [vmem:[#allocation11 + $0x590] sm:$0xff]
    %v1917 = vld [vmem:[#allocation11 + $0x598] sm:$0xff]
    %v1918 = vld [vmem:[#allocation11 + $0x5a0] sm:$0xff]
    %v1919 = vld [vmem:[#allocation11 + $0x5a8] sm:$0xff]
    %v1920 = vld [vmem:[#allocation11 + $0x5b0] sm:$0xff]
    %v1921 = vld [vmem:[#allocation11 + $0x5b8] sm:$0xff]
    %v1922 = vld [vmem:[#allocation11 + $0x5c0] sm:$0xff]
    %v1923 = vld [vmem:[#allocation11 + $0x5c8] sm:$0xff]
    %v1924 = vld [vmem:[#allocation11 + $0x5d0] sm:$0xff]
    %v1925 = vld [vmem:[#allocation11 + $0x5d8] sm:$0xff]
    %v1926 = vld [vmem:[#allocation11 + $0x5e0] sm:$0xff]
    %v1927 = vld [vmem:[#allocation11 + $0x5e8] sm:$0xff]
    %v1928 = vld [vmem:[#allocation11 + $0x5f0] sm:$0xff]
    %v1929 = vld [vmem:[#allocation11 + $0x5f8] sm:$0xff]
    %v1930 = vld [vmem:[%s11] sm:$0x3f]
    %v1932 = vlaneseq
    %v1933 = vshrl.u32 %v1932, 7
    %v1934 = vsub.s32 0, %v1933
    %v1935 = vrot.slane %v1930, %v1934
    %v1936 = vlaneseq
    %v1937 = vshrl.u32 %v1936, 7
    %v1938 = vsub.s32 1, %v1937
    %v1939 = vrot.slane %v1930, %v1938
    %v1940 = vlaneseq
    %v1941 = vshrl.u32 %v1940, 7
    %v1942 = vsub.s32 2, %v1941
    %v1943 = vrot.slane %v1930, %v1942
    %v1944 = vlaneseq
    %v1945 = vshrl.u32 %v1944, 7
    %v1946 = vsub.s32 3, %v1945
    %v1947 = vrot.slane %v1930, %v1946
    %v1948 = vlaneseq
    %v1949 = vshrl.u32 %v1948, 7
    %v1950 = vsub.s32 4, %v1949
    %v1951 = vrot.slane %v1930, %v1950
    %v1952 = vlaneseq
    %v1953 = vshrl.u32 %v1952, 7
    %v1954 = vsub.s32 5, %v1953
    %v1955 = vrot.slane %v1930, %v1954
    %1962 = vmatprep.subr.mxu0 %v1739
    %1963 = vmatpush1.msra.mxu0 %v1738
    %1964 = vmatprep.subr.mxu0 %v1745
    %1965 = vmatpush1.msra.mxu0 %v1744
    %1966 = vmatprep.subr.mxu0 %v1751
    %1967 = vmatpush1.msra.mxu0 %v1750
    %1968 = vmatprep.subr.mxu0 %v1757
    %1969 = vmatpush1.msra.mxu0 %v1756
    %1970 = vmatprep.subr.mxu0 %v1763
    %1971 = vmatpush1.msra.mxu0 %v1762
    %1972 = vmatprep.subr.mxu0 %v1769
    %1973 = vmatpush1.msra.mxu0 %v1768
    %1974 = vmatprep.subr.mxu0 %v1775
    %1975 = vmatpush1.msra.mxu0 %v1774
    %1976 = vmatprep.subr.mxu0 %v1781
    %1977 = vmatpush1.msra.mxu0 %v1780
    %1978 = vmatprep.subr.mxu0 %v1787
    %1979 = vmatpush1.msra.mxu0 %v1786
    %1980 = vmatprep.subr.mxu0 %v1793
    %1981 = vmatpush1.msra.mxu0 %v1792
    %1982 = vmatprep.subr.mxu0 %v1799
    %1983 = vmatpush1.msra.mxu0 %v1798
    %1984 = vmatprep.subr.mxu0 %v1805
    %1985 = vmatpush1.msra.mxu0 %v1804
    %1986 = vmatprep.subr.mxu0 %v1811
    %1987 = vmatpush1.msra.mxu0 %v1810
    %1988 = vmatprep.subr.mxu0 %v1817
    %1989 = vmatpush1.msra.mxu0 %v1816
    %1990 = vmatprep.subr.mxu0 %v1823
    %1991 = vmatpush1.msra.mxu0 %v1822
    %1992 = vmatprep.subr.mxu0 %v1829
    %1993 = vmatpush1.msra.mxu0 %v1828
    %1994 = vmatprep.subr.mxu0 %v1835
    %1995 = vmatpush1.msra.mxu0 %v1834
    %1996 = vmatprep.subr.mxu0 %v1841
    %1997 = vmatpush1.msra.mxu0 %v1840
    %1998 = vmatprep.subr.mxu0 %v1847
    %1999 = vmatpush1.msra.mxu0 %v1846
    %2000 = vmatprep.subr.mxu0 %v1853
    %2001 = vmatpush1.msra.mxu0 %v1852
    %2002 = vmatprep.subr.mxu0 %v1859
    %2003 = vmatpush1.msra.mxu0 %v1858
    %2004 = vmatprep.subr.mxu0 %v1865
    %2005 = vmatpush1.msra.mxu0 %v1864
    %2006 = vmatprep.subr.mxu0 %v1871
    %2007 = vmatpush1.msra.mxu0 %v1870
    %2008 = vmatprep.subr.mxu0 %v1877
    %2009 = vmatpush1.msra.mxu0 %v1876
    %2010 = vmatprep.subr.mxu0 %v1883
    %2011 = vmatpush1.msra.mxu0 %v1882
    %2012 = vmatprep.subr.mxu0 %v1889
    %2013 = vmatpush1.msra.mxu0 %v1888
    %2014 = vmatprep.subr.mxu0 %v1895
    %2015 = vmatpush1.msra.mxu0 %v1894
    %2016 = vmatprep.subr.mxu0 %v1901
    %2017 = vmatpush1.msra.mxu0 %v1900
    %2018 = vmatprep.subr.mxu0 %v1907
    %2019 = vmatpush1.msra.mxu0 %v1906
    %2020 = vmatprep.subr.mxu0 %v1913
    %2021 = vmatpush1.msra.mxu0 %v1912
    %2022 = vmatprep.subr.mxu0 %v1919
    %2023 = vmatpush1.msra.mxu0 %v1918
    %2024 = vmatprep.subr.mxu0 %v1925
    %2025 = vmatpush1.msra.mxu0 %v1924
    %2026 = vmatprep.mubr.f32.mxu0 %v1737
    %2027 = vmatmul.mubr.f32.gmra.mrb[0].mxu0 %v1736
    %v2028 = vpop.f32.mrb[0].mxu0
    %v2029 = vadd.f32 %v1935, %v2028
    %v2030 = vpop.f32.mrb[0].mxu0
    %v2031 = vadd.f32 %v1939, %v2030
    %2032 = vdwg.mxu0
    %2033 = vmatprep.subr.mxu0 %v1741
    %2034 = vmatpush1.msra.mxu0 %v1740
    %2035 = vmatprep.subr.mxu0 %v1747
    %2036 = vmatpush1.msra.mxu0 %v1746
    %2037 = vmatprep.subr.mxu0 %v1753
    %2038 = vmatpush1.msra.mxu0 %v1752
    %2039 = vmatprep.subr.mxu0 %v1759
    %2040 = vmatpush1.msra.mxu0 %v1758
    %2041 = vmatprep.subr.mxu0 %v1765
    %2042 = vmatpush1.msra.mxu0 %v1764
    %2043 = vmatprep.subr.mxu0 %v1771
    %2044 = vmatpush1.msra.mxu0 %v1770
    %2045 = vmatprep.subr.mxu0 %v1777
    %2046 = vmatpush1.msra.mxu0 %v1776
    %2047 = vmatprep.subr.mxu0 %v1783
    %2048 = vmatpush1.msra.mxu0 %v1782
    %2049 = vmatprep.subr.mxu0 %v1789
    %2050 = vmatpush1.msra.mxu0 %v1788
    %2051 = vmatprep.subr.mxu0 %v1795
    %2052 = vmatpush1.msra.mxu0 %v1794
    %2053 = vmatprep.subr.mxu0 %v1801
    %2054 = vmatpush1.msra.mxu0 %v1800
    %2055 = vmatprep.subr.mxu0 %v1807
    %2056 = vmatpush1.msra.mxu0 %v1806
    %2057 = vmatprep.subr.mxu0 %v1813
    %2058 = vmatpush1.msra.mxu0 %v1812
    %2059 = vmatprep.subr.mxu0 %v1819
    %2060 = vmatpush1.msra.mxu0 %v1818
    %2061 = vmatprep.subr.mxu0 %v1825
    %2062 = vmatpush1.msra.mxu0 %v1824
    %2063 = vmatprep.subr.mxu0 %v1831
    %2064 = vmatpush1.msra.mxu0 %v1830
    %2065 = vmatprep.subr.mxu0 %v1837
    %2066 = vmatpush1.msra.mxu0 %v1836
    %2067 = vmatprep.subr.mxu0 %v1843
    %2068 = vmatpush1.msra.mxu0 %v1842
    %2069 = vmatprep.subr.mxu0 %v1849
    %2070 = vmatpush1.msra.mxu0 %v1848
    %2071 = vmatprep.subr.mxu0 %v1855
    %2072 = vmatpush1.msra.mxu0 %v1854
    %2073 = vmatprep.subr.mxu0 %v1861
    %2074 = vmatpush1.msra.mxu0 %v1860
    %2075 = vmatprep.subr.mxu0 %v1867
    %2076 = vmatpush1.msra.mxu0 %v1866
    %2077 = vmatprep.subr.mxu0 %v1873
    %2078 = vmatpush1.msra.mxu0 %v1872
    %2079 = vmatprep.subr.mxu0 %v1879
    %2080 = vmatpush1.msra.mxu0 %v1878
    %2081 = vmatprep.subr.mxu0 %v1885
    %2082 = vmatpush1.msra.mxu0 %v1884
    %2083 = vmatprep.subr.mxu0 %v1891
    %2084 = vmatpush1.msra.mxu0 %v1890
    %2085 = vmatprep.subr.mxu0 %v1897
    %2086 = vmatpush1.msra.mxu0 %v1896
    %2087 = vmatprep.subr.mxu0 %v1903
    %2088 = vmatpush1.msra.mxu0 %v1902
    %2089 = vmatprep.subr.mxu0 %v1909
    %2090 = vmatpush1.msra.mxu0 %v1908
    %2091 = vmatprep.subr.mxu0 %v1915
    %2092 = vmatpush1.msra.mxu0 %v1914
    %2093 = vmatprep.subr.mxu0 %v1921
    %2094 = vmatpush1.msra.mxu0 %v1920
    %2095 = vmatprep.subr.mxu0 %v1927
    %2096 = vmatpush1.msra.mxu0 %v1926
    %2097 = vmatprep.mubr.f32.mxu0 %v1737
    %2098 = vmatmul.mubr.f32.gmra.mrb[0].mxu0 %v1736
    %v2099 = vpop.f32.mrb[0].mxu0
    %v2100 = vadd.f32 %v1943, %v2099
    %v2101 = vpop.f32.mrb[0].mxu0
    %v2102 = vadd.f32 %v1947, %v2101
    %2103 = vdwg.mxu0
    %2104 = vmatprep.subr.mxu0 %v1743
    %2105 = vmatpush1.msra.mxu0 %v1742
    %2106 = vmatprep.subr.mxu0 %v1749
    %2107 = vmatpush1.msra.mxu0 %v1748
    %2108 = vmatprep.subr.mxu0 %v1755
    %2109 = vmatpush1.msra.mxu0 %v1754
    %2110 = vmatprep.subr.mxu0 %v1761
    %2111 = vmatpush1.msra.mxu0 %v1760
    %2112 = vmatprep.subr.mxu0 %v1767
    %2113 = vmatpush1.msra.mxu0 %v1766
    %2114 = vmatprep.subr.mxu0 %v1773
    %2115 = vmatpush1.msra.mxu0 %v1772
    %2116 = vmatprep.subr.mxu0 %v1779
    %2117 = vmatpush1.msra.mxu0 %v1778
    %2118 = vmatprep.subr.mxu0 %v1785
    %2119 = vmatpush1.msra.mxu0 %v1784
    %2120 = vmatprep.subr.mxu0 %v1791
    %2121 = vmatpush1.msra.mxu0 %v1790
    %2122 = vmatprep.subr.mxu0 %v1797
    %2123 = vmatpush1.msra.mxu0 %v1796
    %2124 = vmatprep.subr.mxu0 %v1803
    %2125 = vmatpush1.msra.mxu0 %v1802
    %2126 = vmatprep.subr.mxu0 %v1809
    %2127 = vmatpush1.msra.mxu0 %v1808
    %2128 = vmatprep.subr.mxu0 %v1815
    %2129 = vmatpush1.msra.mxu0 %v1814
    %2130 = vmatprep.subr.mxu0 %v1821
    %2131 = vmatpush1.msra.mxu0 %v1820
    %2132 = vmatprep.subr.mxu0 %v1827
    %2133 = vmatpush1.msra.mxu0 %v1826
    %2134 = vmatprep.subr.mxu0 %v1833
    %2135 = vmatpush1.msra.mxu0 %v1832
    %2136 = vmatprep.subr.mxu0 %v1839
    %2137 = vmatpush1.msra.mxu0 %v1838
    %2138 = vmatprep.subr.mxu0 %v1845
    %2139 = vmatpush1.msra.mxu0 %v1844
    %2140 = vmatprep.subr.mxu0 %v1851
    %2141 = vmatpush1.msra.mxu0 %v1850
    %2142 = vmatprep.subr.mxu0 %v1857
    %2143 = vmatpush1.msra.mxu0 %v1856
    %2144 = vmatprep.subr.mxu0 %v1863
    %2145 = vmatpush1.msra.mxu0 %v1862
    %2146 = vmatprep.subr.mxu0 %v1869
    %2147 = vmatpush1.msra.mxu0 %v1868
    %2148 = vmatprep.subr.mxu0 %v1875
    %2149 = vmatpush1.msra.mxu0 %v1874
    %2150 = vmatprep.subr.mxu0 %v1881
    %2151 = vmatpush1.msra.mxu0 %v1880
    %2152 = vmatprep.subr.mxu0 %v1887
    %2153 = vmatpush1.msra.mxu0 %v1886
    %2154 = vmatprep.subr.mxu0 %v1893
    %2155 = vmatpush1.msra.mxu0 %v1892
    %2156 = vmatprep.subr.mxu0 %v1899
    %2157 = vmatpush1.msra.mxu0 %v1898
    %2158 = vmatprep.subr.mxu0 %v1905
    %2159 = vmatpush1.msra.mxu0 %v1904
    %2160 = vmatprep.subr.mxu0 %v1911
    %2161 = vmatpush1.msra.mxu0 %v1910
    %2162 = vmatprep.subr.mxu0 %v1917
    %2163 = vmatpush1.msra.mxu0 %v1916
    %2164 = vmatprep.subr.mxu0 %v1923
    %2165 = vmatpush1.msra.mxu0 %v1922
    %2166 = vmatprep.subr.mxu0 %v1929
    %2167 = vmatpush1.msra.mxu0 %v1928
    %2168 = vmatprep.mubr.f32.mxu0 %v1737
    %2169 = vmatmul.mubr.f32.gmra.mrb[0].mxu0 %v1736
    %v2170 = vpop.f32.mrb[0].mxu0
    %v2171 = vadd.f32 %v1951, %v2170
    %v2172 = vpop.f32.mrb[0].mxu0
    %v2173 = vadd.f32 %v1955, %v2172
    %2174 = vdwg.mxu0
    %2175 = vst [vmem:[#allocation13] sm:$0xff] %v2029
    %2176 = vst [vmem:[#allocation13 + $0x8] sm:$0xff] %v2031
    %2177 = vst [vmem:[#allocation13 + $0x10] sm:$0xff] %v2100
    %2178 = vst [vmem:[#allocation13 + $0x18] sm:$0xff] %v2102
    %2179 = vst [vmem:[#allocation13 + $0x20] sm:$0xff] %v2171
    %2180 = vst [vmem:[#allocation13 + $0x28] sm:$0xff] %v2173
    // Predicated region
    $region74: #{tpu_custom_call.1} parent=1 // pred_check
      _
    $region75: #{tpu_custom_call.1} parent=1 // pred_check_branch
      %2182 = sbr.rel (0) target = $region77
    $region76: #{tpu_custom_call.1} parent=1 // pred_region
      %s2184 = ssub.s32 768, 768
      %2185 = vsyncadd [#allocation4], %s2184
      %s2187 = sshll.u32 [#allocation13], 4
      %s2188 = int_to_ptr.vmem [resolvable:$true] %s2187
      %2190 = dma.vmem_to_hbm [thread:$0]  %s2188, 768, %s12, [#allocation4]
    $region77: #{tpu_custom_call.1} parent=1 // pred_fallthru
      _
    // Predicated region
    $region78: #{tpu_custom_call.1} parent=1 // pred_check
      _
    $region79: #{tpu_custom_call.1} parent=1 // pred_check_branch
      %2192 = sbr.rel (0) target = $region81
    $region80: #{tpu_custom_call.1} parent=1 // pred_region
      %2193 = dma.done [#allocation4], 768
    $region81: #{tpu_custom_call.1} parent=1 // pred_fallthru
      _
    %2194 = vsyncpa [#allocation3], 1
    %2195 = vsyncpa [#allocation6], 1
    %2196 = vsyncpa [#allocation9], 1
    %2197 = vsyncpa [#allocation12], 1
    %2198 = vsyncpa [#allocation4], 1

</llo_original>
